<compile_context>
chip_gen: v5e
topology: v5e:2x2
jax: 0.10.0
libtpu: 0.0.40
codegen_flags: <defaults>
</compile_context>

<pallas_src>
import jax
import jax.numpy as jnp
from jax.experimental import pallas as pl
from jax.experimental.pallas import tpu as pltpu


def _round_up(v, m):
    return (v + m - 1) // m * m


def _gelu_exact(x):
    # PyTorch F.gelu default is the exact erf form.  erf is evaluated with the
    # Abramowitz & Stegun 7.1.26 rational approximation (|err| < 1.5e-7) so the
    # kernel only needs exp / mul / add / where (EUP + VPU).
    z = x * 0.7071067811865476
    a = jnp.abs(z)
    t = 1.0 / (1.0 + 0.3275911 * a)
    poly = t * (0.254829592 + t * (-0.284496736 + t * (1.421413741
             + t * (-1.453152027 + t * 1.061405429))))
    erf_abs = 1.0 - poly * jnp.exp(-a * a)
    erf = jnp.where(z >= 0.0, erf_abs, -erf_abs)
    return 0.5 * x * (1.0 + erf)


def _layer_norm(h, gamma, beta, eps=1e-5):
    mu = jnp.mean(h, axis=-1, keepdims=True)
    var = jnp.mean(jnp.square(h - mu), axis=-1, keepdims=True)
    return (h - mu) * jax.lax.rsqrt(var + eps) * gamma + beta


def make_dds_conv_kernel(T, C, kernel_size, n_layers, pad8, mxu_dtype):
    k = kernel_size
    Tp = T + 2 * pad8

    def kernel(x_ref, m_ref, wdw_ref, bdw_ref, g1_ref, be1_ref,
               wl_ref, bl_ref, g2_ref, be2_ref, out_ref, xpad_ref):
        # Zero the scratch once per invocation; the two pad strips stay zero
        # because per-layer stores only touch rows [pad8, pad8 + T).
        xpad_ref[...] = jnp.zeros((Tp, C), jnp.float32)

        x = x_ref[0].astype(jnp.float32)        # (T, C)
        m = m_ref[0].astype(jnp.float32)        # (T, 1)

        for i in range(n_layers):
            dil = k ** i
            pad = (k * dil - dil) // 2

            # ---- depthwise dilated conv (groups == channels) ----
            xpad_ref[pad8:pad8 + T, :] = x * m   # sublane-aligned interior store
            xp = xpad_ref[...]                   # (Tp, C), kept in registers
            w_i = wdw_ref[i]                     # (k, C)
            y = jnp.zeros((T, C), jnp.float32) + bdw_ref[i]
            for j in range(k):
                o = j * dil - pad                # static tap offset
                tap = xp[pad8 + o: pad8 + o + T, :]
                y = y + tap * w_i[j:j + 1, :]

            # ---- LayerNorm (channel dim) -> GELU ----
            y = _layer_norm(y, g1_ref[i], be1_ref[i])
            y = _gelu_exact(y)

            # ---- pointwise Linear over channels: one MXU matmul ----
            y = jnp.dot(y.astype(mxu_dtype), wl_ref[i].astype(mxu_dtype),
                        preferred_element_type=jnp.float32) + bl_ref[i]

            # ---- LayerNorm -> GELU ----
            y = _layer_norm(y, g2_ref[i], be2_ref[i])
            y = _gelu_exact(y)
            # TODO(synk): dropout is identity (eval mode / p_dropout == 0).

            x = x + y                            # residual

        out_ref[0] = (x * m).astype(out_ref.dtype)

    return kernel


def dds_conv_pallas(x, x_mask, params, kernel_size, n_layers, g=None,
                    mxu_dtype=jnp.float32):
    """DDSConv forward.  x: (B, C, T), x_mask: (B, 1, T) (PyTorch NCL layout).

    params (stacked over layers, PyTorch conventions):
      conv_w (L, C, 1, k)   depthwise Conv1d weights     conv_b (L, C)
      lin_w  (L, C, C)      Linear weights (out, in)     lin_b  (L, C)
      norm1_g / norm1_b / norm2_g / norm2_b  (L, C)
    """
    B, C, T = x.shape
    k, L = kernel_size, n_layers
    if g is not None:
        x = x + g            # conditioning add done in the wrapper (glue)

    # layout plumbing only: NCL -> (B, T, C) / (B, T, 1); no jnp.pad round trip
    x_btc = jnp.transpose(x, (0, 2, 1)).astype(jnp.float32)
    m_bt1 = jnp.transpose(x_mask, (0, 2, 1)).astype(jnp.float32)

    # kernel-layout parameters
    w_dw = jnp.transpose(params['conv_w'][:, :, 0, :], (0, 2, 1))  # (L, k, C)
    b_dw = params['conv_b'].reshape(L, 1, C)
    w_l = jnp.transpose(params['lin_w'], (0, 2, 1))                # (L, C, C) = W^T
    b_l = params['lin_b'].reshape(L, 1, C)
    g1 = params['norm1_g'].reshape(L, 1, C)
    be1 = params['norm1_b'].reshape(L, 1, C)
    g2 = params['norm2_g'].reshape(L, 1, C)
    be2 = params['norm2_b'].reshape(L, 1, C)

    max_pad = (k ** (L - 1)) * (k - 1) // 2      # largest dilation's padding
    pad8 = _round_up(max(max_pad, 1), 8)         # aligned interior offset
    Tp = T + 2 * pad8

    def full(shape):
        nd = len(shape)
        return pl.BlockSpec(shape, lambda b, _nd=nd: (0,) * _nd)

    kernel = make_dds_conv_kernel(T, C, k, L, pad8, mxu_dtype)
    out = pl.pallas_call(
        kernel,
        out_shape=jax.ShapeDtypeStruct((B, T, C), jnp.float32),
        grid=(B,),
        in_specs=[
            pl.BlockSpec((1, T, C), lambda b: (b, 0, 0)),
            pl.BlockSpec((1, T, 1), lambda b: (b, 0, 0)),
            full((L, k, C)), full((L, 1, C)),
            full((L, 1, C)), full((L, 1, C)),
            full((L, C, C)), full((L, 1, C)),
            full((L, 1, C)), full((L, 1, C)),
        ],
        out_specs=pl.BlockSpec((1, T, C), lambda b: (b, 0, 0)),
        scratch_shapes=[pltpu.VMEM((Tp, C), jnp.float32)],
        compiler_params=pltpu.CompilerParams(
            dimension_semantics=("parallel",)),
    )(x_btc, m_bt1, w_dw, b_dw, g1, be1, w_l, b_l, g2, be2)

    return jnp.transpose(out, (0, 2, 1))         # back to (B, C, T)


# ---------------- plain-JAX reference (correctness check) ----------------
def reference_forward(x, x_mask, params, kernel_size, n_layers, g=None):
    if g is not None:
        x = x + g
    C = x.shape[1]
    hi = jax.lax.Precision.HIGHEST

    def layer_norm_ncl(h, gamma, beta, eps=1e-5):
        mu = h.mean(axis=1, keepdims=True)
        var = ((h - mu) ** 2).mean(axis=1, keepdims=True)
        return ((h - mu) / jnp.sqrt(var + eps)
                * gamma[None, :, None] + beta[None, :, None])

    for i in range(n_layers):
        dil = kernel_size ** i
        pad = (kernel_size * dil - dil) // 2
        y = jax.lax.conv_general_dilated(
            x * x_mask, params['conv_w'][i], window_strides=(1,),
            padding=[(pad, pad)], rhs_dilation=(dil,),
            dimension_numbers=('NCH', 'OIH', 'NCH'),
            feature_group_count=C, precision=hi)
        y = y + params['conv_b'][i][None, :, None]
        y = layer_norm_ncl(y, params['norm1_g'][i], params['norm1_b'][i])
        y = jax.nn.gelu(y, approximate=False)
        y = (jnp.einsum('bct,oc->bot', y, params['lin_w'][i], precision=hi)
             + params['lin_b'][i][None, :, None])
        y = layer_norm_ncl(y, params['norm2_g'][i], params['norm2_b'][i])
        y = jax.nn.gelu(y, approximate=False)
        x = x + y
    return x * x_mask


if __name__ == "__main__":
    # small shapes: batch=2, channels=8, seq=16, kernel_size=3, n_layers=3
    B, C, T = 2, 8, 16
    K, L = 3, 3
    key = jax.random.PRNGKey(0)
    ks = jax.random.split(key, 12)

    params = {
        'conv_w': 0.3 * jax.random.normal(ks[0], (L, C, 1, K), jnp.float32),
        'conv_b': 0.1 * jax.random.normal(ks[1], (L, C), jnp.float32),
        'lin_w': 0.3 * jax.random.normal(ks[2], (L, C, C), jnp.float32),
        'lin_b': 0.1 * jax.random.normal(ks[3], (L, C), jnp.float32),
        'norm1_g': 1.0 + 0.05 * jax.random.normal(ks[4], (L, C), jnp.float32),
        'norm1_b': 0.05 * jax.random.normal(ks[5], (L, C), jnp.float32),
        'norm2_g': 1.0 + 0.05 * jax.random.normal(ks[6], (L, C), jnp.float32),
        'norm2_b': 0.05 * jax.random.normal(ks[7], (L, C), jnp.float32),
    }

    x = jax.random.normal(ks[8], (B, C, T), jnp.float32)
    # variable-length sequences via the mask
    lengths = jnp.array([T, T - 5])
    x_mask = (jnp.arange(T)[None, :] < lengths[:, None]).astype(jnp.float32)
    x_mask = x_mask[:, None, :]                  # (B, 1, T)

    out = dds_conv_pallas(x, x_mask, params, K, L, g=None)
    out = jax.block_until_ready(out)

    ref = reference_forward(x, x_mask, params, K, L, g=None)
    assert out.shape == (B, C, T), out.shape
    err = jnp.max(jnp.abs(out - ref))
    assert jnp.allclose(out, ref, atol=2e-4, rtol=2e-4), f"max err {err}"

    print("KERNEL_OK")
</pallas_src>

<mosaic_0001>
module attributes {stable_mosaic.version = 11 : i64} {
  func.func @kernel(%arg0: i32, %arg1: memref<1x16x8xf32, #tpu.memory_space<vmem>>, %arg2: memref<1x16x1xf32, #tpu.memory_space<vmem>>, %arg3: memref<3x3x8xf32, #tpu.memory_space<vmem>>, %arg4: memref<3x1x8xf32, #tpu.memory_space<vmem>>, %arg5: memref<3x1x8xf32, #tpu.memory_space<vmem>>, %arg6: memref<3x1x8xf32, #tpu.memory_space<vmem>>, %arg7: memref<3x8x8xf32, #tpu.memory_space<vmem>>, %arg8: memref<3x1x8xf32, #tpu.memory_space<vmem>>, %arg9: memref<3x1x8xf32, #tpu.memory_space<vmem>>, %arg10: memref<3x1x8xf32, #tpu.memory_space<vmem>>, %arg11: memref<1x16x8xf32, #tpu.memory_space<vmem>>, %arg12: memref<48x8xf32, #tpu.memory_space<vmem>>) attributes {dimension_semantics = [#tpu.dimension_semantics<parallel>], iteration_bounds = array<i64: 2>, scalar_prefetch = 0 : i64, scratch_operands = 1 : i64, tpu.core_type = #tpu.core_type<tc>, window_params = [{transform_indices = @transform_0, window_bounds = array<i64: 1, 16, 8>}, {transform_indices = @transform_1, window_bounds = array<i64: 1, 16, 1>}, {pipeline_mode = #tpu.pipeline_mode<synchronous>, transform_indices = @transform_2, window_bounds = array<i64: 3, 3, 8>}, {pipeline_mode = #tpu.pipeline_mode<synchronous>, transform_indices = @transform_3, window_bounds = array<i64: 3, 1, 8>}, {pipeline_mode = #tpu.pipeline_mode<synchronous>, transform_indices = @transform_4, window_bounds = array<i64: 3, 1, 8>}, {pipeline_mode = #tpu.pipeline_mode<synchronous>, transform_indices = @transform_5, window_bounds = array<i64: 3, 1, 8>}, {pipeline_mode = #tpu.pipeline_mode<synchronous>, transform_indices = @transform_6, window_bounds = array<i64: 3, 8, 8>}, {pipeline_mode = #tpu.pipeline_mode<synchronous>, transform_indices = @transform_7, window_bounds = array<i64: 3, 1, 8>}, {pipeline_mode = #tpu.pipeline_mode<synchronous>, transform_indices = @transform_8, window_bounds = array<i64: 3, 1, 8>}, {pipeline_mode = #tpu.pipeline_mode<synchronous>, transform_indices = @transform_9, window_bounds = array<i64: 3, 1, 8>}, {transform_indices = @transform_10, window_bounds = array<i64: 1, 16, 8>}]} {
    %cst = arith.constant 0.000000e+00 : f32
    %0 = vector.broadcast %cst : f32 to vector<48x8xf32>
    %c0 = arith.constant 0 : index
    %c0_0 = arith.constant 0 : index
    %1 = vector.load %arg12[%c0, %c0_0] : memref<48x8xf32, #tpu.memory_space<vmem>>, vector<48x8xf32>
    tpu.vector_store %arg12[%c0, %c0_0], %0 {strides = array<i32>} : memref<48x8xf32, #tpu.memory_space<vmem>>, vector<48x8xf32>,
    %c0_1 = arith.constant 0 : index
    %c0_2 = arith.constant 0 : index
    %c0_3 = arith.constant 0 : index
    %2 = vector.load %arg1[%c0_1, %c0_2, %c0_3] : memref<1x16x8xf32, #tpu.memory_space<vmem>>, vector<1x16x8xf32>
    %3 = vector.shape_cast %2 : vector<1x16x8xf32> to vector<16x8xf32>
    %c0_4 = arith.constant 0 : index
    %c0_5 = arith.constant 0 : index
    %c0_6 = arith.constant 0 : index
    %4 = vector.load %arg2[%c0_4, %c0_5, %c0_6] : memref<1x16x1xf32, #tpu.memory_space<vmem>>, vector<1x16x1xf32>
    %5 = vector.shape_cast %4 : vector<1x16x1xf32> to vector<16x1xf32>
    %6 = vector.broadcast %5 : vector<16x1xf32> to vector<16x8xf32>
    %7 = arith.mulf %3, %6 : vector<16x8xf32>
    %c16 = arith.constant 16 : index
    %c0_7 = arith.constant 0 : index
    %8 = vector.load %arg12[%c16, %c0_7] : memref<48x8xf32, #tpu.memory_space<vmem>>, vector<16x8xf32>
    tpu.vector_store %arg12[%c16, %c0_7], %7 {strides = array<i32>} : memref<48x8xf32, #tpu.memory_space<vmem>>, vector<16x8xf32>,
    %c0_8 = arith.constant 0 : index
    %c0_9 = arith.constant 0 : index
    %9 = vector.load %arg12[%c0_8, %c0_9] : memref<48x8xf32, #tpu.memory_space<vmem>>, vector<48x8xf32>
    %c0_10 = arith.constant 0 : index
    %c0_11 = arith.constant 0 : index
    %c0_12 = arith.constant 0 : index
    %10 = vector.load %arg3[%c0_10, %c0_11, %c0_12] : memref<3x3x8xf32, #tpu.memory_space<vmem>>, vector<1x3x8xf32>
    %11 = vector.shape_cast %10 : vector<1x3x8xf32> to vector<3x8xf32>
    %cst_13 = arith.constant 0.000000e+00 : f32
    %12 = vector.broadcast %cst_13 : f32 to vector<16x8xf32>
    %c0_14 = arith.constant 0 : index
    %c0_15 = arith.constant 0 : index
    %c0_16 = arith.constant 0 : index
    %13 = vector.load %arg4[%c0_14, %c0_15, %c0_16] : memref<3x1x8xf32, #tpu.memory_space<vmem>>, vector<1x1x8xf32>
    %14 = vector.shape_cast %13 : vector<1x1x8xf32> to vector<1x8xf32>
    %15 = vector.broadcast %14 : vector<1x8xf32> to vector<16x8xf32>
    %16 = arith.addf %12, %15 : vector<16x8xf32>
    %17 = vector.extract_strided_slice %9 {offsets = [15, 0], sizes = [16, 8], strides = [1, 1]} : vector<48x8xf32> to vector<16x8xf32>
    %18 = vector.extract_strided_slice %11 {offsets = [0, 0], sizes = [1, 8], strides = [1, 1]} : vector<3x8xf32> to vector<1x8xf32>
    %19 = vector.broadcast %18 : vector<1x8xf32> to vector<16x8xf32>
    %20 = arith.mulf %17, %19 : vector<16x8xf32>
    %21 = arith.addf %16, %20 : vector<16x8xf32>
    %22 = vector.extract_strided_slice %9 {offsets = [16, 0], sizes = [16, 8], strides = [1, 1]} : vector<48x8xf32> to vector<16x8xf32>
    %23 = vector.extract_strided_slice %11 {offsets = [1, 0], sizes = [1, 8], strides = [1, 1]} : vector<3x8xf32> to vector<1x8xf32>
    %24 = vector.broadcast %23 : vector<1x8xf32> to vector<16x8xf32>
    %25 = arith.mulf %22, %24 : vector<16x8xf32>
    %26 = arith.addf %21, %25 : vector<16x8xf32>
    %27 = vector.extract_strided_slice %9 {offsets = [17, 0], sizes = [16, 8], strides = [1, 1]} : vector<48x8xf32> to vector<16x8xf32>
    %28 = vector.extract_strided_slice %11 {offsets = [2, 0], sizes = [1, 8], strides = [1, 1]} : vector<3x8xf32> to vector<1x8xf32>
    %29 = vector.broadcast %28 : vector<1x8xf32> to vector<16x8xf32>
    %30 = arith.mulf %27, %29 : vector<16x8xf32>
    %31 = arith.addf %26, %30 : vector<16x8xf32>
    %c0_17 = arith.constant 0 : index
    %c0_18 = arith.constant 0 : index
    %c0_19 = arith.constant 0 : index
    %32 = vector.load %arg5[%c0_17, %c0_18, %c0_19] : memref<3x1x8xf32, #tpu.memory_space<vmem>>, vector<1x1x8xf32>
    %33 = vector.shape_cast %32 : vector<1x1x8xf32> to vector<1x8xf32>
    %c0_20 = arith.constant 0 : index
    %c0_21 = arith.constant 0 : index
    %c0_22 = arith.constant 0 : index
    %34 = vector.load %arg6[%c0_20, %c0_21, %c0_22] : memref<3x1x8xf32, #tpu.memory_space<vmem>>, vector<1x1x8xf32>
    %35 = vector.shape_cast %34 : vector<1x1x8xf32> to vector<1x8xf32>
    %cst_23 = arith.constant dense<0.000000e+00> : vector<16xf32>
    %36 = vector.multi_reduction <add>, %31, %cst_23 [1] : vector<16x8xf32> to vector<16xf32>
    %37 = vector.shape_cast %36 : vector<16xf32> to vector<16x1xf32>
    %cst_24 = arith.constant 8.000000e+00 : f32
    %38 = vector.broadcast %cst_24 : f32 to vector<16x1xf32>
    %39 = arith.divf %37, %38 : vector<16x1xf32>
    %40 = vector.broadcast %39 : vector<16x1xf32> to vector<16x8xf32>
    %41 = arith.subf %31, %40 : vector<16x8xf32>
    %42 = arith.mulf %41, %41 : vector<16x8xf32>
    %cst_25 = arith.constant dense<0.000000e+00> : vector<16xf32>
    %43 = vector.multi_reduction <add>, %42, %cst_25 [1] : vector<16x8xf32> to vector<16xf32>
    %44 = vector.shape_cast %43 : vector<16xf32> to vector<16x1xf32>
    %cst_26 = arith.constant 8.000000e+00 : f32
    %45 = vector.broadcast %cst_26 : f32 to vector<16x1xf32>
    %46 = arith.divf %44, %45 : vector<16x1xf32>
    %47 = vector.broadcast %39 : vector<16x1xf32> to vector<16x8xf32>
    %48 = arith.subf %31, %47 : vector<16x8xf32>
    %cst_27 = arith.constant 9.99999974E-6 : f32
    %49 = vector.broadcast %cst_27 : f32 to vector<16x1xf32>
    %50 = arith.addf %46, %49 : vector<16x1xf32>
    %51 = math.rsqrt %50 : vector<16x1xf32>
    %52 = vector.broadcast %51 : vector<16x1xf32> to vector<16x8xf32>
    %53 = arith.mulf %48, %52 : vector<16x8xf32>
    %54 = vector.broadcast %33 : vector<1x8xf32> to vector<16x8xf32>
    %55 = arith.mulf %53, %54 : vector<16x8xf32>
    %56 = vector.broadcast %35 : vector<1x8xf32> to vector<16x8xf32>
    %57 = arith.addf %55, %56 : vector<16x8xf32>
    %cst_28 = arith.constant 0.707106769 : f32
    %58 = vector.broadcast %cst_28 : f32 to vector<16x8xf32>
    %59 = arith.mulf %57, %58 : vector<16x8xf32>
    %60 = math.absf %59 : vector<16x8xf32>
    %cst_29 = arith.constant 0.327591091 : f32
    %61 = vector.broadcast %cst_29 : f32 to vector<16x8xf32>
    %62 = arith.mulf %61, %60 : vector<16x8xf32>
    %cst_30 = arith.constant 1.000000e+00 : f32
    %63 = vector.broadcast %cst_30 : f32 to vector<16x8xf32>
    %64 = arith.addf %63, %62 : vector<16x8xf32>
    %cst_31 = arith.constant 1.000000e+00 : f32
    %65 = vector.broadcast %cst_31 : f32 to vector<16x8xf32>
    %66 = arith.divf %65, %64 : vector<16x8xf32>
    %cst_32 = arith.constant 1.06140542 : f32
    %67 = vector.broadcast %cst_32 : f32 to vector<16x8xf32>
    %68 = arith.mulf %66, %67 : vector<16x8xf32>
    %cst_33 = arith.constant -1.45315206 : f32
    %69 = vector.broadcast %cst_33 : f32 to vector<16x8xf32>
    %70 = arith.addf %69, %68 : vector<16x8xf32>
    %71 = arith.mulf %66, %70 : vector<16x8xf32>
    %cst_34 = arith.constant 1.42141378 : f32
    %72 = vector.broadcast %cst_34 : f32 to vector<16x8xf32>
    %73 = arith.addf %72, %71 : vector<16x8xf32>
    %74 = arith.mulf %66, %73 : vector<16x8xf32>
    %cst_35 = arith.constant -0.284496725 : f32
    %75 = vector.broadcast %cst_35 : f32 to vector<16x8xf32>
    %76 = arith.addf %75, %74 : vector<16x8xf32>
    %77 = arith.mulf %66, %76 : vector<16x8xf32>
    %cst_36 = arith.constant 0.254829586 : f32
    %78 = vector.broadcast %cst_36 : f32 to vector<16x8xf32>
    %79 = arith.addf %78, %77 : vector<16x8xf32>
    %80 = arith.mulf %66, %79 : vector<16x8xf32>
    %cst_37 = arith.constant 0.000000e+00 : f32
    %81 = vector.broadcast %cst_37 : f32 to vector<16x8xf32>
    %82 = arith.subf %81, %60 : vector<16x8xf32>
    %83 = arith.mulf %82, %60 : vector<16x8xf32>
    %84 = math.exp %83 : vector<16x8xf32>
    %85 = arith.mulf %80, %84 : vector<16x8xf32>
    %cst_38 = arith.constant 1.000000e+00 : f32
    %86 = vector.broadcast %cst_38 : f32 to vector<16x8xf32>
    %87 = arith.subf %86, %85 : vector<16x8xf32>
    %cst_39 = arith.constant 0.000000e+00 : f32
    %88 = vector.broadcast %cst_39 : f32 to vector<16x8xf32>
    %89 = arith.cmpf oge, %59, %88 : vector<16x8xf32>
    %cst_40 = arith.constant 0.000000e+00 : f32
    %90 = vector.broadcast %cst_40 : f32 to vector<16x8xf32>
    %91 = arith.subf %90, %87 : vector<16x8xf32>
    %92 = arith.select %89, %87, %91 : vector<16x8xi1>, vector<16x8xf32>
    %cst_41 = arith.constant 5.000000e-01 : f32
    %93 = vector.broadcast %cst_41 : f32 to vector<16x8xf32>
    %94 = arith.mulf %93, %57 : vector<16x8xf32>
    %cst_42 = arith.constant 1.000000e+00 : f32
    %95 = vector.broadcast %cst_42 : f32 to vector<16x8xf32>
    %96 = arith.addf %95, %92 : vector<16x8xf32>
    %97 = arith.mulf %94, %96 : vector<16x8xf32>
    %c0_43 = arith.constant 0 : index
    %c0_44 = arith.constant 0 : index
    %c0_45 = arith.constant 0 : index
    %98 = vector.load %arg7[%c0_43, %c0_44, %c0_45] : memref<3x8x8xf32, #tpu.memory_space<vmem>>, vector<1x8x8xf32>
    %99 = vector.shape_cast %98 : vector<1x8x8xf32> to vector<8x8xf32>
    %cst_46 = arith.constant dense<0.000000e+00> : vector<16x8xf32>
    %100 = tpu.matmul %97, %99, %cst_46 {dimension_numbers = #tpu.dot_dimension_numbers<[1], [0], [0], [1], [0, 0, 1, 1], [], []>} : vector<16x8xf32>, vector<8x8xf32>, vector<16x8xf32> -> vector<16x8xf32>
    %c0_47 = arith.constant 0 : index
    %c0_48 = arith.constant 0 : index
    %c0_49 = arith.constant 0 : index
    %101 = vector.load %arg8[%c0_47, %c0_48, %c0_49] : memref<3x1x8xf32, #tpu.memory_space<vmem>>, vector<1x1x8xf32>
    %102 = vector.shape_cast %101 : vector<1x1x8xf32> to vector<1x8xf32>
    %103 = vector.broadcast %102 : vector<1x8xf32> to vector<16x8xf32>
    %104 = arith.addf %100, %103 : vector<16x8xf32>
    %c0_50 = arith.constant 0 : index
    %c0_51 = arith.constant 0 : index
    %c0_52 = arith.constant 0 : index
    %105 = vector.load %arg9[%c0_50, %c0_51, %c0_52] : memref<3x1x8xf32, #tpu.memory_space<vmem>>, vector<1x1x8xf32>
    %106 = vector.shape_cast %105 : vector<1x1x8xf32> to vector<1x8xf32>
    %c0_53 = arith.constant 0 : index
    %c0_54 = arith.constant 0 : index
    %c0_55 = arith.constant 0 : index
    %107 = vector.load %arg10[%c0_53, %c0_54, %c0_55] : memref<3x1x8xf32, #tpu.memory_space<vmem>>, vector<1x1x8xf32>
    %108 = vector.shape_cast %107 : vector<1x1x8xf32> to vector<1x8xf32>
    %cst_56 = arith.constant dense<0.000000e+00> : vector<16xf32>
    %109 = vector.multi_reduction <add>, %104, %cst_56 [1] : vector<16x8xf32> to vector<16xf32>
    %110 = vector.shape_cast %109 : vector<16xf32> to vector<16x1xf32>
    %cst_57 = arith.constant 8.000000e+00 : f32
    %111 = vector.broadcast %cst_57 : f32 to vector<16x1xf32>
    %112 = arith.divf %110, %111 : vector<16x1xf32>
    %113 = vector.broadcast %112 : vector<16x1xf32> to vector<16x8xf32>
    %114 = arith.subf %104, %113 : vector<16x8xf32>
    %115 = arith.mulf %114, %114 : vector<16x8xf32>
    %cst_58 = arith.constant dense<0.000000e+00> : vector<16xf32>
    %116 = vector.multi_reduction <add>, %115, %cst_58 [1] : vector<16x8xf32> to vector<16xf32>
    %117 = vector.shape_cast %116 : vector<16xf32> to vector<16x1xf32>
    %cst_59 = arith.constant 8.000000e+00 : f32
    %118 = vector.broadcast %cst_59 : f32 to vector<16x1xf32>
    %119 = arith.divf %117, %118 : vector<16x1xf32>
    %120 = vector.broadcast %112 : vector<16x1xf32> to vector<16x8xf32>
    %121 = arith.subf %104, %120 : vector<16x8xf32>
    %cst_60 = arith.constant 9.99999974E-6 : f32
    %122 = vector.broadcast %cst_60 : f32 to vector<16x1xf32>
    %123 = arith.addf %119, %122 : vector<16x1xf32>
    %124 = math.rsqrt %123 : vector<16x1xf32>
    %125 = vector.broadcast %124 : vector<16x1xf32> to vector<16x8xf32>
    %126 = arith.mulf %121, %125 : vector<16x8xf32>
    %127 = vector.broadcast %106 : vector<1x8xf32> to vector<16x8xf32>
    %128 = arith.mulf %126, %127 : vector<16x8xf32>
    %129 = vector.broadcast %108 : vector<1x8xf32> to vector<16x8xf32>
    %130 = arith.addf %128, %129 : vector<16x8xf32>
    %cst_61 = arith.constant 0.707106769 : f32
    %131 = vector.broadcast %cst_61 : f32 to vector<16x8xf32>
    %132 = arith.mulf %130, %131 : vector<16x8xf32>
    %133 = math.absf %132 : vector<16x8xf32>
    %cst_62 = arith.constant 0.327591091 : f32
    %134 = vector.broadcast %cst_62 : f32 to vector<16x8xf32>
    %135 = arith.mulf %134, %133 : vector<16x8xf32>
    %cst_63 = arith.constant 1.000000e+00 : f32
    %136 = vector.broadcast %cst_63 : f32 to vector<16x8xf32>
    %137 = arith.addf %136, %135 : vector<16x8xf32>
    %cst_64 = arith.constant 1.000000e+00 : f32
    %138 = vector.broadcast %cst_64 : f32 to vector<16x8xf32>
    %139 = arith.divf %138, %137 : vector<16x8xf32>
    %cst_65 = arith.constant 1.06140542 : f32
    %140 = vector.broadcast %cst_65 : f32 to vector<16x8xf32>
    %141 = arith.mulf %139, %140 : vector<16x8xf32>
    %cst_66 = arith.constant -1.45315206 : f32
    %142 = vector.broadcast %cst_66 : f32 to vector<16x8xf32>
    %143 = arith.addf %142, %141 : vector<16x8xf32>
    %144 = arith.mulf %139, %143 : vector<16x8xf32>
    %cst_67 = arith.constant 1.42141378 : f32
    %145 = vector.broadcast %cst_67 : f32 to vector<16x8xf32>
    %146 = arith.addf %145, %144 : vector<16x8xf32>
    %147 = arith.mulf %139, %146 : vector<16x8xf32>
    %cst_68 = arith.constant -0.284496725 : f32
    %148 = vector.broadcast %cst_68 : f32 to vector<16x8xf32>
    %149 = arith.addf %148, %147 : vector<16x8xf32>
    %150 = arith.mulf %139, %149 : vector<16x8xf32>
    %cst_69 = arith.constant 0.254829586 : f32
    %151 = vector.broadcast %cst_69 : f32 to vector<16x8xf32>
    %152 = arith.addf %151, %150 : vector<16x8xf32>
    %153 = arith.mulf %139, %152 : vector<16x8xf32>
    %cst_70 = arith.constant 0.000000e+00 : f32
    %154 = vector.broadcast %cst_70 : f32 to vector<16x8xf32>
    %155 = arith.subf %154, %133 : vector<16x8xf32>
    %156 = arith.mulf %155, %133 : vector<16x8xf32>
    %157 = math.exp %156 : vector<16x8xf32>
    %158 = arith.mulf %153, %157 : vector<16x8xf32>
    %cst_71 = arith.constant 1.000000e+00 : f32
    %159 = vector.broadcast %cst_71 : f32 to vector<16x8xf32>
    %160 = arith.subf %159, %158 : vector<16x8xf32>
    %cst_72 = arith.constant 0.000000e+00 : f32
    %161 = vector.broadcast %cst_72 : f32 to vector<16x8xf32>
    %162 = arith.cmpf oge, %132, %161 : vector<16x8xf32>
    %cst_73 = arith.constant 0.000000e+00 : f32
    %163 = vector.broadcast %cst_73 : f32 to vector<16x8xf32>
    %164 = arith.subf %163, %160 : vector<16x8xf32>
    %165 = arith.select %162, %160, %164 : vector<16x8xi1>, vector<16x8xf32>
    %cst_74 = arith.constant 5.000000e-01 : f32
    %166 = vector.broadcast %cst_74 : f32 to vector<16x8xf32>
    %167 = arith.mulf %166, %130 : vector<16x8xf32>
    %cst_75 = arith.constant 1.000000e+00 : f32
    %168 = vector.broadcast %cst_75 : f32 to vector<16x8xf32>
    %169 = arith.addf %168, %165 : vector<16x8xf32>
    %170 = arith.mulf %167, %169 : vector<16x8xf32>
    %171 = arith.addf %3, %170 : vector<16x8xf32>
    %172 = vector.broadcast %5 : vector<16x1xf32> to vector<16x8xf32>
    %173 = arith.mulf %171, %172 : vector<16x8xf32>
    %c16_76 = arith.constant 16 : index
    %c0_77 = arith.constant 0 : index
    %174 = vector.load %arg12[%c16_76, %c0_77] : memref<48x8xf32, #tpu.memory_space<vmem>>, vector<16x8xf32>
    tpu.vector_store %arg12[%c16_76, %c0_77], %173 {strides = array<i32>} : memref<48x8xf32, #tpu.memory_space<vmem>>, vector<16x8xf32>,
    %c0_78 = arith.constant 0 : index
    %c0_79 = arith.constant 0 : index
    %175 = vector.load %arg12[%c0_78, %c0_79] : memref<48x8xf32, #tpu.memory_space<vmem>>, vector<48x8xf32>
    %c1 = arith.constant 1 : index
    %c0_80 = arith.constant 0 : index
    %c0_81 = arith.constant 0 : index
    %176 = vector.load %arg3[%c1, %c0_80, %c0_81] : memref<3x3x8xf32, #tpu.memory_space<vmem>>, vector<1x3x8xf32>
    %177 = vector.shape_cast %176 : vector<1x3x8xf32> to vector<3x8xf32>
    %cst_82 = arith.constant 0.000000e+00 : f32
    %178 = vector.broadcast %cst_82 : f32 to vector<16x8xf32>
    %c1_83 = arith.constant 1 : index
    %c0_84 = arith.constant 0 : index
    %c0_85 = arith.constant 0 : index
    %179 = vector.load %arg4[%c1_83, %c0_84, %c0_85] : memref<3x1x8xf32, #tpu.memory_space<vmem>>, vector<1x1x8xf32>
    %180 = vector.shape_cast %179 : vector<1x1x8xf32> to vector<1x8xf32>
    %181 = vector.broadcast %180 : vector<1x8xf32> to vector<16x8xf32>
    %182 = arith.addf %178, %181 : vector<16x8xf32>
    %183 = vector.extract_strided_slice %175 {offsets = [13, 0], sizes = [16, 8], strides = [1, 1]} : vector<48x8xf32> to vector<16x8xf32>
    %184 = vector.extract_strided_slice %177 {offsets = [0, 0], sizes = [1, 8], strides = [1, 1]} : vector<3x8xf32> to vector<1x8xf32>
    %185 = vector.broadcast %184 : vector<1x8xf32> to vector<16x8xf32>
    %186 = arith.mulf %183, %185 : vector<16x8xf32>
    %187 = arith.addf %182, %186 : vector<16x8xf32>
    %188 = vector.extract_strided_slice %175 {offsets = [16, 0], sizes = [16, 8], strides = [1, 1]} : vector<48x8xf32> to vector<16x8xf32>
    %189 = vector.extract_strided_slice %177 {offsets = [1, 0], sizes = [1, 8], strides = [1, 1]} : vector<3x8xf32> to vector<1x8xf32>
    %190 = vector.broadcast %189 : vector<1x8xf32> to vector<16x8xf32>
    %191 = arith.mulf %188, %190 : vector<16x8xf32>
    %192 = arith.addf %187, %191 : vector<16x8xf32>
    %193 = vector.extract_strided_slice %175 {offsets = [19, 0], sizes = [16, 8], strides = [1, 1]} : vector<48x8xf32> to vector<16x8xf32>
    %194 = vector.extract_strided_slice %177 {offsets = [2, 0], sizes = [1, 8], strides = [1, 1]} : vector<3x8xf32> to vector<1x8xf32>
    %195 = vector.broadcast %194 : vector<1x8xf32> to vector<16x8xf32>
    %196 = arith.mulf %193, %195 : vector<16x8xf32>
    %197 = arith.addf %192, %196 : vector<16x8xf32>
    %c1_86 = arith.constant 1 : index
    %c0_87 = arith.constant 0 : index
    %c0_88 = arith.constant 0 : index
    %198 = vector.load %arg5[%c1_86, %c0_87, %c0_88] : memref<3x1x8xf32, #tpu.memory_space<vmem>>, vector<1x1x8xf32>
    %199 = vector.shape_cast %198 : vector<1x1x8xf32> to vector<1x8xf32>
    %c1_89 = arith.constant 1 : index
    %c0_90 = arith.constant 0 : index
    %c0_91 = arith.constant 0 : index
    %200 = vector.load %arg6[%c1_89, %c0_90, %c0_91] : memref<3x1x8xf32, #tpu.memory_space<vmem>>, vector<1x1x8xf32>
    %201 = vector.shape_cast %200 : vector<1x1x8xf32> to vector<1x8xf32>
    %cst_92 = arith.constant dense<0.000000e+00> : vector<16xf32>
    %202 = vector.multi_reduction <add>, %197, %cst_92 [1] : vector<16x8xf32> to vector<16xf32>
    %203 = vector.shape_cast %202 : vector<16xf32> to vector<16x1xf32>
    %cst_93 = arith.constant 8.000000e+00 : f32
    %204 = vector.broadcast %cst_93 : f32 to vector<16x1xf32>
    %205 = arith.divf %203, %204 : vector<16x1xf32>
    %206 = vector.broadcast %205 : vector<16x1xf32> to vector<16x8xf32>
    %207 = arith.subf %197, %206 : vector<16x8xf32>
    %208 = arith.mulf %207, %207 : vector<16x8xf32>
    %cst_94 = arith.constant dense<0.000000e+00> : vector<16xf32>
    %209 = vector.multi_reduction <add>, %208, %cst_94 [1] : vector<16x8xf32> to vector<16xf32>
    %210 = vector.shape_cast %209 : vector<16xf32> to vector<16x1xf32>
    %cst_95 = arith.constant 8.000000e+00 : f32
    %211 = vector.broadcast %cst_95 : f32 to vector<16x1xf32>
    %212 = arith.divf %210, %211 : vector<16x1xf32>
    %213 = vector.broadcast %205 : vector<16x1xf32> to vector<16x8xf32>
    %214 = arith.subf %197, %213 : vector<16x8xf32>
    %cst_96 = arith.constant 9.99999974E-6 : f32
    %215 = vector.broadcast %cst_96 : f32 to vector<16x1xf32>
    %216 = arith.addf %212, %215 : vector<16x1xf32>
    %217 = math.rsqrt %216 : vector<16x1xf32>
    %218 = vector.broadcast %217 : vector<16x1xf32> to vector<16x8xf32>
    %219 = arith.mulf %214, %218 : vector<16x8xf32>
    %220 = vector.broadcast %199 : vector<1x8xf32> to vector<16x8xf32>
    %221 = arith.mulf %219, %220 : vector<16x8xf32>
    %222 = vector.broadcast %201 : vector<1x8xf32> to vector<16x8xf32>
    %223 = arith.addf %221, %222 : vector<16x8xf32>
    %cst_97 = arith.constant 0.707106769 : f32
    %224 = vector.broadcast %cst_97 : f32 to vector<16x8xf32>
    %225 = arith.mulf %223, %224 : vector<16x8xf32>
    %226 = math.absf %225 : vector<16x8xf32>
    %cst_98 = arith.constant 0.327591091 : f32
    %227 = vector.broadcast %cst_98 : f32 to vector<16x8xf32>
    %228 = arith.mulf %227, %226 : vector<16x8xf32>
    %cst_99 = arith.constant 1.000000e+00 : f32
    %229 = vector.broadcast %cst_99 : f32 to vector<16x8xf32>
    %230 = arith.addf %229, %228 : vector<16x8xf32>
    %cst_100 = arith.constant 1.000000e+00 : f32
    %231 = vector.broadcast %cst_100 : f32 to vector<16x8xf32>
    %232 = arith.divf %231, %230 : vector<16x8xf32>
    %cst_101 = arith.constant 1.06140542 : f32
    %233 = vector.broadcast %cst_101 : f32 to vector<16x8xf32>
    %234 = arith.mulf %232, %233 : vector<16x8xf32>
    %cst_102 = arith.constant -1.45315206 : f32
    %235 = vector.broadcast %cst_102 : f32 to vector<16x8xf32>
    %236 = arith.addf %235, %234 : vector<16x8xf32>
    %237 = arith.mulf %232, %236 : vector<16x8xf32>
    %cst_103 = arith.constant 1.42141378 : f32
    %238 = vector.broadcast %cst_103 : f32 to vector<16x8xf32>
    %239 = arith.addf %238, %237 : vector<16x8xf32>
    %240 = arith.mulf %232, %239 : vector<16x8xf32>
    %cst_104 = arith.constant -0.284496725 : f32
    %241 = vector.broadcast %cst_104 : f32 to vector<16x8xf32>
    %242 = arith.addf %241, %240 : vector<16x8xf32>
    %243 = arith.mulf %232, %242 : vector<16x8xf32>
    %cst_105 = arith.constant 0.254829586 : f32
    %244 = vector.broadcast %cst_105 : f32 to vector<16x8xf32>
    %245 = arith.addf %244, %243 : vector<16x8xf32>
    %246 = arith.mulf %232, %245 : vector<16x8xf32>
    %cst_106 = arith.constant 0.000000e+00 : f32
    %247 = vector.broadcast %cst_106 : f32 to vector<16x8xf32>
    %248 = arith.subf %247, %226 : vector<16x8xf32>
    %249 = arith.mulf %248, %226 : vector<16x8xf32>
    %250 = math.exp %249 : vector<16x8xf32>
    %251 = arith.mulf %246, %250 : vector<16x8xf32>
    %cst_107 = arith.constant 1.000000e+00 : f32
    %252 = vector.broadcast %cst_107 : f32 to vector<16x8xf32>
    %253 = arith.subf %252, %251 : vector<16x8xf32>
    %cst_108 = arith.constant 0.000000e+00 : f32
    %254 = vector.broadcast %cst_108 : f32 to vector<16x8xf32>
    %255 = arith.cmpf oge, %225, %254 : vector<16x8xf32>
    %cst_109 = arith.constant 0.000000e+00 : f32
    %256 = vector.broadcast %cst_109 : f32 to vector<16x8xf32>
    %257 = arith.subf %256, %253 : vector<16x8xf32>
    %258 = arith.select %255, %253, %257 : vector<16x8xi1>, vector<16x8xf32>
    %cst_110 = arith.constant 5.000000e-01 : f32
    %259 = vector.broadcast %cst_110 : f32 to vector<16x8xf32>
    %260 = arith.mulf %259, %223 : vector<16x8xf32>
    %cst_111 = arith.constant 1.000000e+00 : f32
    %261 = vector.broadcast %cst_111 : f32 to vector<16x8xf32>
    %262 = arith.addf %261, %258 : vector<16x8xf32>
    %263 = arith.mulf %260, %262 : vector<16x8xf32>
    %c1_112 = arith.constant 1 : index
    %c0_113 = arith.constant 0 : index
    %c0_114 = arith.constant 0 : index
    %264 = vector.load %arg7[%c1_112, %c0_113, %c0_114] : memref<3x8x8xf32, #tpu.memory_space<vmem>>, vector<1x8x8xf32>
    %265 = vector.shape_cast %264 : vector<1x8x8xf32> to vector<8x8xf32>
    %cst_115 = arith.constant dense<0.000000e+00> : vector<16x8xf32>
    %266 = tpu.matmul %263, %265, %cst_115 {dimension_numbers = #tpu.dot_dimension_numbers<[1], [0], [0], [1], [0, 0, 1, 1], [], []>} : vector<16x8xf32>, vector<8x8xf32>, vector<16x8xf32> -> vector<16x8xf32>
    %c1_116 = arith.constant 1 : index
    %c0_117 = arith.constant 0 : index
    %c0_118 = arith.constant 0 : index
    %267 = vector.load %arg8[%c1_116, %c0_117, %c0_118] : memref<3x1x8xf32, #tpu.memory_space<vmem>>, vector<1x1x8xf32>
    %268 = vector.shape_cast %267 : vector<1x1x8xf32> to vector<1x8xf32>
    %269 = vector.broadcast %268 : vector<1x8xf32> to vector<16x8xf32>
    %270 = arith.addf %266, %269 : vector<16x8xf32>
    %c1_119 = arith.constant 1 : index
    %c0_120 = arith.constant 0 : index
    %c0_121 = arith.constant 0 : index
    %271 = vector.load %arg9[%c1_119, %c0_120, %c0_121] : memref<3x1x8xf32, #tpu.memory_space<vmem>>, vector<1x1x8xf32>
    %272 = vector.shape_cast %271 : vector<1x1x8xf32> to vector<1x8xf32>
    %c1_122 = arith.constant 1 : index
    %c0_123 = arith.constant 0 : index
    %c0_124 = arith.constant 0 : index
    %273 = vector.load %arg10[%c1_122, %c0_123, %c0_124] : memref<3x1x8xf32, #tpu.memory_space<vmem>>, vector<1x1x8xf32>
    %274 = vector.shape_cast %273 : vector<1x1x8xf32> to vector<1x8xf32>
    %cst_125 = arith.constant dense<0.000000e+00> : vector<16xf32>
    %275 = vector.multi_reduction <add>, %270, %cst_125 [1] : vector<16x8xf32> to vector<16xf32>
    %276 = vector.shape_cast %275 : vector<16xf32> to vector<16x1xf32>
    %cst_126 = arith.constant 8.000000e+00 : f32
    %277 = vector.broadcast %cst_126 : f32 to vector<16x1xf32>
    %278 = arith.divf %276, %277 : vector<16x1xf32>
    %279 = vector.broadcast %278 : vector<16x1xf32> to vector<16x8xf32>
    %280 = arith.subf %270, %279 : vector<16x8xf32>
    %281 = arith.mulf %280, %280 : vector<16x8xf32>
    %cst_127 = arith.constant dense<0.000000e+00> : vector<16xf32>
    %282 = vector.multi_reduction <add>, %281, %cst_127 [1] : vector<16x8xf32> to vector<16xf32>
    %283 = vector.shape_cast %282 : vector<16xf32> to vector<16x1xf32>
    %cst_128 = arith.constant 8.000000e+00 : f32
    %284 = vector.broadcast %cst_128 : f32 to vector<16x1xf32>
    %285 = arith.divf %283, %284 : vector<16x1xf32>
    %286 = vector.broadcast %278 : vector<16x1xf32> to vector<16x8xf32>
    %287 = arith.subf %270, %286 : vector<16x8xf32>
    %cst_129 = arith.constant 9.99999974E-6 : f32
    %288 = vector.broadcast %cst_129 : f32 to vector<16x1xf32>
    %289 = arith.addf %285, %288 : vector<16x1xf32>
    %290 = math.rsqrt %289 : vector<16x1xf32>
    %291 = vector.broadcast %290 : vector<16x1xf32> to vector<16x8xf32>
    %292 = arith.mulf %287, %291 : vector<16x8xf32>
    %293 = vector.broadcast %272 : vector<1x8xf32> to vector<16x8xf32>
    %294 = arith.mulf %292, %293 : vector<16x8xf32>
    %295 = vector.broadcast %274 : vector<1x8xf32> to vector<16x8xf32>
    %296 = arith.addf %294, %295 : vector<16x8xf32>
    %cst_130 = arith.constant 0.707106769 : f32
    %297 = vector.broadcast %cst_130 : f32 to vector<16x8xf32>
    %298 = arith.mulf %296, %297 : vector<16x8xf32>
    %299 = math.absf %298 : vector<16x8xf32>
    %cst_131 = arith.constant 0.327591091 : f32
    %300 = vector.broadcast %cst_131 : f32 to vector<16x8xf32>
    %301 = arith.mulf %300, %299 : vector<16x8xf32>
    %cst_132 = arith.constant 1.000000e+00 : f32
    %302 = vector.broadcast %cst_132 : f32 to vector<16x8xf32>
    %303 = arith.addf %302, %301 : vector<16x8xf32>
    %cst_133 = arith.constant 1.000000e+00 : f32
    %304 = vector.broadcast %cst_133 : f32 to vector<16x8xf32>
    %305 = arith.divf %304, %303 : vector<16x8xf32>
    %cst_134 = arith.constant 1.06140542 : f32
    %306 = vector.broadcast %cst_134 : f32 to vector<16x8xf32>
    %307 = arith.mulf %305, %306 : vector<16x8xf32>
    %cst_135 = arith.constant -1.45315206 : f32
    %308 = vector.broadcast %cst_135 : f32 to vector<16x8xf32>
    %309 = arith.addf %308, %307 : vector<16x8xf32>
    %310 = arith.mulf %305, %309 : vector<16x8xf32>
    %cst_136 = arith.constant 1.42141378 : f32
    %311 = vector.broadcast %cst_136 : f32 to vector<16x8xf32>
    %312 = arith.addf %311, %310 : vector<16x8xf32>
    %313 = arith.mulf %305, %312 : vector<16x8xf32>
    %cst_137 = arith.constant -0.284496725 : f32
    %314 = vector.broadcast %cst_137 : f32 to vector<16x8xf32>
    %315 = arith.addf %314, %313 : vector<16x8xf32>
    %316 = arith.mulf %305, %315 : vector<16x8xf32>
    %cst_138 = arith.constant 0.254829586 : f32
    %317 = vector.broadcast %cst_138 : f32 to vector<16x8xf32>
    %318 = arith.addf %317, %316 : vector<16x8xf32>
    %319 = arith.mulf %305, %318 : vector<16x8xf32>
    %cst_139 = arith.constant 0.000000e+00 : f32
    %320 = vector.broadcast %cst_139 : f32 to vector<16x8xf32>
    %321 = arith.subf %320, %299 : vector<16x8xf32>
    %322 = arith.mulf %321, %299 : vector<16x8xf32>
    %323 = math.exp %322 : vector<16x8xf32>
    %324 = arith.mulf %319, %323 : vector<16x8xf32>
    %cst_140 = arith.constant 1.000000e+00 : f32
    %325 = vector.broadcast %cst_140 : f32 to vector<16x8xf32>
    %326 = arith.subf %325, %324 : vector<16x8xf32>
    %cst_141 = arith.constant 0.000000e+00 : f32
    %327 = vector.broadcast %cst_141 : f32 to vector<16x8xf32>
    %328 = arith.cmpf oge, %298, %327 : vector<16x8xf32>
    %cst_142 = arith.constant 0.000000e+00 : f32
    %329 = vector.broadcast %cst_142 : f32 to vector<16x8xf32>
    %330 = arith.subf %329, %326 : vector<16x8xf32>
    %331 = arith.select %328, %326, %330 : vector<16x8xi1>, vector<16x8xf32>
    %cst_143 = arith.constant 5.000000e-01 : f32
    %332 = vector.broadcast %cst_143 : f32 to vector<16x8xf32>
    %333 = arith.mulf %332, %296 : vector<16x8xf32>
    %cst_144 = arith.constant 1.000000e+00 : f32
    %334 = vector.broadcast %cst_144 : f32 to vector<16x8xf32>
    %335 = arith.addf %334, %331 : vector<16x8xf32>
    %336 = arith.mulf %333, %335 : vector<16x8xf32>
    %337 = arith.addf %171, %336 : vector<16x8xf32>
    %338 = vector.broadcast %5 : vector<16x1xf32> to vector<16x8xf32>
    %339 = arith.mulf %337, %338 : vector<16x8xf32>
    %c16_145 = arith.constant 16 : index
    %c0_146 = arith.constant 0 : index
    %340 = vector.load %arg12[%c16_145, %c0_146] : memref<48x8xf32, #tpu.memory_space<vmem>>, vector<16x8xf32>
    tpu.vector_store %arg12[%c16_145, %c0_146], %339 {strides = array<i32>} : memref<48x8xf32, #tpu.memory_space<vmem>>, vector<16x8xf32>,
    %c0_147 = arith.constant 0 : index
    %c0_148 = arith.constant 0 : index
    %341 = vector.load %arg12[%c0_147, %c0_148] : memref<48x8xf32, #tpu.memory_space<vmem>>, vector<48x8xf32>
    %c2 = arith.constant 2 : index
    %c0_149 = arith.constant 0 : index
    %c0_150 = arith.constant 0 : index
    %342 = vector.load %arg3[%c2, %c0_149, %c0_150] : memref<3x3x8xf32, #tpu.memory_space<vmem>>, vector<1x3x8xf32>
    %343 = vector.shape_cast %342 : vector<1x3x8xf32> to vector<3x8xf32>
    %cst_151 = arith.constant 0.000000e+00 : f32
    %344 = vector.broadcast %cst_151 : f32 to vector<16x8xf32>
    %c2_152 = arith.constant 2 : index
    %c0_153 = arith.constant 0 : index
    %c0_154 = arith.constant 0 : index
    %345 = vector.load %arg4[%c2_152, %c0_153, %c0_154] : memref<3x1x8xf32, #tpu.memory_space<vmem>>, vector<1x1x8xf32>
    %346 = vector.shape_cast %345 : vector<1x1x8xf32> to vector<1x8xf32>
    %347 = vector.broadcast %346 : vector<1x8xf32> to vector<16x8xf32>
    %348 = arith.addf %344, %347 : vector<16x8xf32>
    %349 = vector.extract_strided_slice %341 {offsets = [7, 0], sizes = [16, 8], strides = [1, 1]} : vector<48x8xf32> to vector<16x8xf32>
    %350 = vector.extract_strided_slice %343 {offsets = [0, 0], sizes = [1, 8], strides = [1, 1]} : vector<3x8xf32> to vector<1x8xf32>
    %351 = vector.broadcast %350 : vector<1x8xf32> to vector<16x8xf32>
    %352 = arith.mulf %349, %351 : vector<16x8xf32>
    %353 = arith.addf %348, %352 : vector<16x8xf32>
    %354 = vector.extract_strided_slice %341 {offsets = [16, 0], sizes = [16, 8], strides = [1, 1]} : vector<48x8xf32> to vector<16x8xf32>
    %355 = vector.extract_strided_slice %343 {offsets = [1, 0], sizes = [1, 8], strides = [1, 1]} : vector<3x8xf32> to vector<1x8xf32>
    %356 = vector.broadcast %355 : vector<1x8xf32> to vector<16x8xf32>
    %357 = arith.mulf %354, %356 : vector<16x8xf32>
    %358 = arith.addf %353, %357 : vector<16x8xf32>
    %359 = vector.extract_strided_slice %341 {offsets = [25, 0], sizes = [16, 8], strides = [1, 1]} : vector<48x8xf32> to vector<16x8xf32>
    %360 = vector.extract_strided_slice %343 {offsets = [2, 0], sizes = [1, 8], strides = [1, 1]} : vector<3x8xf32> to vector<1x8xf32>
    %361 = vector.broadcast %360 : vector<1x8xf32> to vector<16x8xf32>
    %362 = arith.mulf %359, %361 : vector<16x8xf32>
    %363 = arith.addf %358, %362 : vector<16x8xf32>
    %c2_155 = arith.constant 2 : index
    %c0_156 = arith.constant 0 : index
    %c0_157 = arith.constant 0 : index
    %364 = vector.load %arg5[%c2_155, %c0_156, %c0_157] : memref<3x1x8xf32, #tpu.memory_space<vmem>>, vector<1x1x8xf32>
    %365 = vector.shape_cast %364 : vector<1x1x8xf32> to vector<1x8xf32>
    %c2_158 = arith.constant 2 : index
    %c0_159 = arith.constant 0 : index
    %c0_160 = arith.constant 0 : index
    %366 = vector.load %arg6[%c2_158, %c0_159, %c0_160] : memref<3x1x8xf32, #tpu.memory_space<vmem>>, vector<1x1x8xf32>
    %367 = vector.shape_cast %366 : vector<1x1x8xf32> to vector<1x8xf32>
    %cst_161 = arith.constant dense<0.000000e+00> : vector<16xf32>
    %368 = vector.multi_reduction <add>, %363, %cst_161 [1] : vector<16x8xf32> to vector<16xf32>
    %369 = vector.shape_cast %368 : vector<16xf32> to vector<16x1xf32>
    %cst_162 = arith.constant 8.000000e+00 : f32
    %370 = vector.broadcast %cst_162 : f32 to vector<16x1xf32>
    %371 = arith.divf %369, %370 : vector<16x1xf32>
    %372 = vector.broadcast %371 : vector<16x1xf32> to vector<16x8xf32>
    %373 = arith.subf %363, %372 : vector<16x8xf32>
    %374 = arith.mulf %373, %373 : vector<16x8xf32>
    %cst_163 = arith.constant dense<0.000000e+00> : vector<16xf32>
    %375 = vector.multi_reduction <add>, %374, %cst_163 [1] : vector<16x8xf32> to vector<16xf32>
    %376 = vector.shape_cast %375 : vector<16xf32> to vector<16x1xf32>
    %cst_164 = arith.constant 8.000000e+00 : f32
    %377 = vector.broadcast %cst_164 : f32 to vector<16x1xf32>
    %378 = arith.divf %376, %377 : vector<16x1xf32>
    %379 = vector.broadcast %371 : vector<16x1xf32> to vector<16x8xf32>
    %380 = arith.subf %363, %379 : vector<16x8xf32>
    %cst_165 = arith.constant 9.99999974E-6 : f32
    %381 = vector.broadcast %cst_165 : f32 to vector<16x1xf32>
    %382 = arith.addf %378, %381 : vector<16x1xf32>
    %383 = math.rsqrt %382 : vector<16x1xf32>
    %384 = vector.broadcast %383 : vector<16x1xf32> to vector<16x8xf32>
    %385 = arith.mulf %380, %384 : vector<16x8xf32>
    %386 = vector.broadcast %365 : vector<1x8xf32> to vector<16x8xf32>
    %387 = arith.mulf %385, %386 : vector<16x8xf32>
    %388 = vector.broadcast %367 : vector<1x8xf32> to vector<16x8xf32>
    %389 = arith.addf %387, %388 : vector<16x8xf32>
    %cst_166 = arith.constant 0.707106769 : f32
    %390 = vector.broadcast %cst_166 : f32 to vector<16x8xf32>
    %391 = arith.mulf %389, %390 : vector<16x8xf32>
    %392 = math.absf %391 : vector<16x8xf32>
    %cst_167 = arith.constant 0.327591091 : f32
    %393 = vector.broadcast %cst_167 : f32 to vector<16x8xf32>
    %394 = arith.mulf %393, %392 : vector<16x8xf32>
    %cst_168 = arith.constant 1.000000e+00 : f32
    %395 = vector.broadcast %cst_168 : f32 to vector<16x8xf32>
    %396 = arith.addf %395, %394 : vector<16x8xf32>
    %cst_169 = arith.constant 1.000000e+00 : f32
    %397 = vector.broadcast %cst_169 : f32 to vector<16x8xf32>
    %398 = arith.divf %397, %396 : vector<16x8xf32>
    %cst_170 = arith.constant 1.06140542 : f32
    %399 = vector.broadcast %cst_170 : f32 to vector<16x8xf32>
    %400 = arith.mulf %398, %399 : vector<16x8xf32>
    %cst_171 = arith.constant -1.45315206 : f32
    %401 = vector.broadcast %cst_171 : f32 to vector<16x8xf32>
    %402 = arith.addf %401, %400 : vector<16x8xf32>
    %403 = arith.mulf %398, %402 : vector<16x8xf32>
    %cst_172 = arith.constant 1.42141378 : f32
    %404 = vector.broadcast %cst_172 : f32 to vector<16x8xf32>
    %405 = arith.addf %404, %403 : vector<16x8xf32>
    %406 = arith.mulf %398, %405 : vector<16x8xf32>
    %cst_173 = arith.constant -0.284496725 : f32
    %407 = vector.broadcast %cst_173 : f32 to vector<16x8xf32>
    %408 = arith.addf %407, %406 : vector<16x8xf32>
    %409 = arith.mulf %398, %408 : vector<16x8xf32>
    %cst_174 = arith.constant 0.254829586 : f32
    %410 = vector.broadcast %cst_174 : f32 to vector<16x8xf32>
    %411 = arith.addf %410, %409 : vector<16x8xf32>
    %412 = arith.mulf %398, %411 : vector<16x8xf32>
    %cst_175 = arith.constant 0.000000e+00 : f32
    %413 = vector.broadcast %cst_175 : f32 to vector<16x8xf32>
    %414 = arith.subf %413, %392 : vector<16x8xf32>
    %415 = arith.mulf %414, %392 : vector<16x8xf32>
    %416 = math.exp %415 : vector<16x8xf32>
    %417 = arith.mulf %412, %416 : vector<16x8xf32>
    %cst_176 = arith.constant 1.000000e+00 : f32
    %418 = vector.broadcast %cst_176 : f32 to vector<16x8xf32>
    %419 = arith.subf %418, %417 : vector<16x8xf32>
    %cst_177 = arith.constant 0.000000e+00 : f32
    %420 = vector.broadcast %cst_177 : f32 to vector<16x8xf32>
    %421 = arith.cmpf oge, %391, %420 : vector<16x8xf32>
    %cst_178 = arith.constant 0.000000e+00 : f32
    %422 = vector.broadcast %cst_178 : f32 to vector<16x8xf32>
    %423 = arith.subf %422, %419 : vector<16x8xf32>
    %424 = arith.select %421, %419, %423 : vector<16x8xi1>, vector<16x8xf32>
    %cst_179 = arith.constant 5.000000e-01 : f32
    %425 = vector.broadcast %cst_179 : f32 to vector<16x8xf32>
    %426 = arith.mulf %425, %389 : vector<16x8xf32>
    %cst_180 = arith.constant 1.000000e+00 : f32
    %427 = vector.broadcast %cst_180 : f32 to vector<16x8xf32>
    %428 = arith.addf %427, %424 : vector<16x8xf32>
    %429 = arith.mulf %426, %428 : vector<16x8xf32>
    %c2_181 = arith.constant 2 : index
    %c0_182 = arith.constant 0 : index
    %c0_183 = arith.constant 0 : index
    %430 = vector.load %arg7[%c2_181, %c0_182, %c0_183] : memref<3x8x8xf32, #tpu.memory_space<vmem>>, vector<1x8x8xf32>
    %431 = vector.shape_cast %430 : vector<1x8x8xf32> to vector<8x8xf32>
    %cst_184 = arith.constant dense<0.000000e+00> : vector<16x8xf32>
    %432 = tpu.matmul %429, %431, %cst_184 {dimension_numbers = #tpu.dot_dimension_numbers<[1], [0], [0], [1], [0, 0, 1, 1], [], []>} : vector<16x8xf32>, vector<8x8xf32>, vector<16x8xf32> -> vector<16x8xf32>
    %c2_185 = arith.constant 2 : index
    %c0_186 = arith.constant 0 : index
    %c0_187 = arith.constant 0 : index
    %433 = vector.load %arg8[%c2_185, %c0_186, %c0_187] : memref<3x1x8xf32, #tpu.memory_space<vmem>>, vector<1x1x8xf32>
    %434 = vector.shape_cast %433 : vector<1x1x8xf32> to vector<1x8xf32>
    %435 = vector.broadcast %434 : vector<1x8xf32> to vector<16x8xf32>
    %436 = arith.addf %432, %435 : vector<16x8xf32>
    %c2_188 = arith.constant 2 : index
    %c0_189 = arith.constant 0 : index
    %c0_190 = arith.constant 0 : index
    %437 = vector.load %arg9[%c2_188, %c0_189, %c0_190] : memref<3x1x8xf32, #tpu.memory_space<vmem>>, vector<1x1x8xf32>
    %438 = vector.shape_cast %437 : vector<1x1x8xf32> to vector<1x8xf32>
    %c2_191 = arith.constant 2 : index
    %c0_192 = arith.constant 0 : index
    %c0_193 = arith.constant 0 : index
    %439 = vector.load %arg10[%c2_191, %c0_192, %c0_193] : memref<3x1x8xf32, #tpu.memory_space<vmem>>, vector<1x1x8xf32>
    %440 = vector.shape_cast %439 : vector<1x1x8xf32> to vector<1x8xf32>
    %cst_194 = arith.constant dense<0.000000e+00> : vector<16xf32>
    %441 = vector.multi_reduction <add>, %436, %cst_194 [1] : vector<16x8xf32> to vector<16xf32>
    %442 = vector.shape_cast %441 : vector<16xf32> to vector<16x1xf32>
    %cst_195 = arith.constant 8.000000e+00 : f32
    %443 = vector.broadcast %cst_195 : f32 to vector<16x1xf32>
    %444 = arith.divf %442, %443 : vector<16x1xf32>
    %445 = vector.broadcast %444 : vector<16x1xf32> to vector<16x8xf32>
    %446 = arith.subf %436, %445 : vector<16x8xf32>
    %447 = arith.mulf %446, %446 : vector<16x8xf32>
    %cst_196 = arith.constant dense<0.000000e+00> : vector<16xf32>
    %448 = vector.multi_reduction <add>, %447, %cst_196 [1] : vector<16x8xf32> to vector<16xf32>
    %449 = vector.shape_cast %448 : vector<16xf32> to vector<16x1xf32>
    %cst_197 = arith.constant 8.000000e+00 : f32
    %450 = vector.broadcast %cst_197 : f32 to vector<16x1xf32>
    %451 = arith.divf %449, %450 : vector<16x1xf32>
    %452 = vector.broadcast %444 : vector<16x1xf32> to vector<16x8xf32>
    %453 = arith.subf %436, %452 : vector<16x8xf32>
    %cst_198 = arith.constant 9.99999974E-6 : f32
    %454 = vector.broadcast %cst_198 : f32 to vector<16x1xf32>
    %455 = arith.addf %451, %454 : vector<16x1xf32>
    %456 = math.rsqrt %455 : vector<16x1xf32>
    %457 = vector.broadcast %456 : vector<16x1xf32> to vector<16x8xf32>
    %458 = arith.mulf %453, %457 : vector<16x8xf32>
    %459 = vector.broadcast %438 : vector<1x8xf32> to vector<16x8xf32>
    %460 = arith.mulf %458, %459 : vector<16x8xf32>
    %461 = vector.broadcast %440 : vector<1x8xf32> to vector<16x8xf32>
    %462 = arith.addf %460, %461 : vector<16x8xf32>
    %cst_199 = arith.constant 0.707106769 : f32
    %463 = vector.broadcast %cst_199 : f32 to vector<16x8xf32>
    %464 = arith.mulf %462, %463 : vector<16x8xf32>
    %465 = math.absf %464 : vector<16x8xf32>
    %cst_200 = arith.constant 0.327591091 : f32
    %466 = vector.broadcast %cst_200 : f32 to vector<16x8xf32>
    %467 = arith.mulf %466, %465 : vector<16x8xf32>
    %cst_201 = arith.constant 1.000000e+00 : f32
    %468 = vector.broadcast %cst_201 : f32 to vector<16x8xf32>
    %469 = arith.addf %468, %467 : vector<16x8xf32>
    %cst_202 = arith.constant 1.000000e+00 : f32
    %470 = vector.broadcast %cst_202 : f32 to vector<16x8xf32>
    %471 = arith.divf %470, %469 : vector<16x8xf32>
    %cst_203 = arith.constant 1.06140542 : f32
    %472 = vector.broadcast %cst_203 : f32 to vector<16x8xf32>
    %473 = arith.mulf %471, %472 : vector<16x8xf32>
    %cst_204 = arith.constant -1.45315206 : f32
    %474 = vector.broadcast %cst_204 : f32 to vector<16x8xf32>
    %475 = arith.addf %474, %473 : vector<16x8xf32>
    %476 = arith.mulf %471, %475 : vector<16x8xf32>
    %cst_205 = arith.constant 1.42141378 : f32
    %477 = vector.broadcast %cst_205 : f32 to vector<16x8xf32>
    %478 = arith.addf %477, %476 : vector<16x8xf32>
    %479 = arith.mulf %471, %478 : vector<16x8xf32>
    %cst_206 = arith.constant -0.284496725 : f32
    %480 = vector.broadcast %cst_206 : f32 to vector<16x8xf32>
    %481 = arith.addf %480, %479 : vector<16x8xf32>
    %482 = arith.mulf %471, %481 : vector<16x8xf32>
    %cst_207 = arith.constant 0.254829586 : f32
    %483 = vector.broadcast %cst_207 : f32 to vector<16x8xf32>
    %484 = arith.addf %483, %482 : vector<16x8xf32>
    %485 = arith.mulf %471, %484 : vector<16x8xf32>
    %cst_208 = arith.constant 0.000000e+00 : f32
    %486 = vector.broadcast %cst_208 : f32 to vector<16x8xf32>
    %487 = arith.subf %486, %465 : vector<16x8xf32>
    %488 = arith.mulf %487, %465 : vector<16x8xf32>
    %489 = math.exp %488 : vector<16x8xf32>
    %490 = arith.mulf %485, %489 : vector<16x8xf32>
    %cst_209 = arith.constant 1.000000e+00 : f32
    %491 = vector.broadcast %cst_209 : f32 to vector<16x8xf32>
    %492 = arith.subf %491, %490 : vector<16x8xf32>
    %cst_210 = arith.constant 0.000000e+00 : f32
    %493 = vector.broadcast %cst_210 : f32 to vector<16x8xf32>
    %494 = arith.cmpf oge, %464, %493 : vector<16x8xf32>
    %cst_211 = arith.constant 0.000000e+00 : f32
    %495 = vector.broadcast %cst_211 : f32 to vector<16x8xf32>
    %496 = arith.subf %495, %492 : vector<16x8xf32>
    %497 = arith.select %494, %492, %496 : vector<16x8xi1>, vector<16x8xf32>
    %cst_212 = arith.constant 5.000000e-01 : f32
    %498 = vector.broadcast %cst_212 : f32 to vector<16x8xf32>
    %499 = arith.mulf %498, %462 : vector<16x8xf32>
    %cst_213 = arith.constant 1.000000e+00 : f32
    %500 = vector.broadcast %cst_213 : f32 to vector<16x8xf32>
    %501 = arith.addf %500, %497 : vector<16x8xf32>
    %502 = arith.mulf %499, %501 : vector<16x8xf32>
    %503 = arith.addf %337, %502 : vector<16x8xf32>
    %504 = vector.broadcast %5 : vector<16x1xf32> to vector<16x8xf32>
    %505 = arith.mulf %503, %504 : vector<16x8xf32>
    %c0_214 = arith.constant 0 : index
    %c0_215 = arith.constant 0 : index
    %c0_216 = arith.constant 0 : index
    %506 = vector.load %arg11[%c0_214, %c0_215, %c0_216] : memref<1x16x8xf32, #tpu.memory_space<vmem>>, vector<1x16x8xf32>
    %507 = vector.shape_cast %506 : vector<1x16x8xf32> to vector<16x8xf32>
    %508 = vector.shape_cast %505 : vector<16x8xf32> to vector<1x16x8xf32>
    tpu.vector_store %arg11[%c0_214, %c0_215, %c0_216], %508 {strides = array<i32>} : memref<1x16x8xf32, #tpu.memory_space<vmem>>, vector<1x16x8xf32>,
    return
  }
  func.func @transform_0(%arg0: i32) -> (i32, i32, i32) {
    %c0_i32 = arith.constant 0 : i32
    %c0_i32_0 = arith.constant 0 : i32
    %c0_i32_1 = arith.constant 0 : i32
    return %arg0, %c0_i32, %c0_i32_0 : i32, i32, i32
  }
  func.func @transform_1(%arg0: i32) -> (i32, i32, i32) {
    %c0_i32 = arith.constant 0 : i32
    %c0_i32_0 = arith.constant 0 : i32
    %c0_i32_1 = arith.constant 0 : i32
    return %arg0, %c0_i32, %c0_i32_0 : i32, i32, i32
  }
  func.func @transform_2(%arg0: i32) -> (i32, i32, i32) {
    %c0_i32 = arith.constant 0 : i32
    %c0_i32_0 = arith.constant 0 : i32
    %c0_i32_1 = arith.constant 0 : i32
    %c0_i32_2 = arith.constant 0 : i32
    return %c0_i32, %c0_i32_0, %c0_i32_1 : i32, i32, i32
  }
  func.func @transform_3(%arg0: i32) -> (i32, i32, i32) {
    %c0_i32 = arith.constant 0 : i32
    %c0_i32_0 = arith.constant 0 : i32
    %c0_i32_1 = arith.constant 0 : i32
    %c0_i32_2 = arith.constant 0 : i32
    return %c0_i32, %c0_i32_0, %c0_i32_1 : i32, i32, i32
  }
  func.func @transform_4(%arg0: i32) -> (i32, i32, i32) {
    %c0_i32 = arith.constant 0 : i32
    %c0_i32_0 = arith.constant 0 : i32
    %c0_i32_1 = arith.constant 0 : i32
    %c0_i32_2 = arith.constant 0 : i32
    return %c0_i32, %c0_i32_0, %c0_i32_1 : i32, i32, i32
  }
  func.func @transform_5(%arg0: i32) -> (i32, i32, i32) {
    %c0_i32 = arith.constant 0 : i32
    %c0_i32_0 = arith.constant 0 : i32
    %c0_i32_1 = arith.constant 0 : i32
    %c0_i32_2 = arith.constant 0 : i32
    return %c0_i32, %c0_i32_0, %c0_i32_1 : i32, i32, i32
  }
  func.func @transform_6(%arg0: i32) -> (i32, i32, i32) {
    %c0_i32 = arith.constant 0 : i32
    %c0_i32_0 = arith.constant 0 : i32
    %c0_i32_1 = arith.constant 0 : i32
    %c0_i32_2 = arith.constant 0 : i32
    return %c0_i32, %c0_i32_0, %c0_i32_1 : i32, i32, i32
  }
  func.func @transform_7(%arg0: i32) -> (i32, i32, i32) {
    %c0_i32 = arith.constant 0 : i32
    %c0_i32_0 = arith.constant 0 : i32
    %c0_i32_1 = arith.constant 0 : i32
    %c0_i32_2 = arith.constant 0 : i32
    return %c0_i32, %c0_i32_0, %c0_i32_1 : i32, i32, i32
  }
  func.func @transform_8(%arg0: i32) -> (i32, i32, i32) {
    %c0_i32 = arith.constant 0 : i32
    %c0_i32_0 = arith.constant 0 : i32
    %c0_i32_1 = arith.constant 0 : i32
    %c0_i32_2 = arith.constant 0 : i32
    return %c0_i32, %c0_i32_0, %c0_i32_1 : i32, i32, i32
  }
  func.func @transform_9(%arg0: i32) -> (i32, i32, i32) {
    %c0_i32 = arith.constant 0 : i32
    %c0_i32_0 = arith.constant 0 : i32
    %c0_i32_1 = arith.constant 0 : i32
    %c0_i32_2 = arith.constant 0 : i32
    return %c0_i32, %c0_i32_0, %c0_i32_1 : i32, i32, i32
  }
  func.func @transform_10(%arg0: i32) -> (i32, i32, i32) {
    %c0_i32 = arith.constant 0 : i32
    %c0_i32_0 = arith.constant 0 : i32
    %c0_i32_1 = arith.constant 0 : i32
    return %arg0, %c0_i32, %c0_i32_0 : i32, i32, i32
  }
}

</mosaic_0001>

<llo_original>
// kernel: tpu_custom_call.1
$region0: #{tpu_custom_call.1}
  #allocation0 [shape = 'u32[]', space=smem, size = 0x4, offset = 0x4, fixed_abs, tag = 'smem constant byte address 0x4 - core index']
  #allocation1 [shape = 'u32[72,128]{1,0:T(1,128)}', space=vmem, size = 0x9000, scoped, tag = 'internal scratch']
  #allocation2 [shape = 'f32[48,8]{1,0:T(8,128)}', space=vmem, size = 0x6000, scoped, tag = 'scratch operand']
  %s0 = inlined_call_operand.vmem [shape: f32[2,16,8], index: 0, kind: input, shape index: {}]
  %s1 = inlined_call_operand.vmem [shape: f32[2,16,1], index: 1, kind: input, shape index: {}]
  %s2 = inlined_call_operand.vmem [shape: f32[3,3,8], index: 2, kind: input, shape index: {}]
  %s3 = inlined_call_operand.vmem [shape: f32[3,1,8], index: 3, kind: input, shape index: {}]
  %s4 = inlined_call_operand.vmem [shape: f32[3,1,8], index: 4, kind: input, shape index: {}]
  %s5 = inlined_call_operand.vmem [shape: f32[3,1,8], index: 5, kind: input, shape index: {}]
  %s6 = inlined_call_operand.vmem [shape: f32[3,8,8], index: 6, kind: input, shape index: {}]
  %s7 = inlined_call_operand.vmem [shape: f32[3,1,8], index: 7, kind: input, shape index: {}]
  %s8 = inlined_call_operand.vmem [shape: f32[3,1,8], index: 8, kind: input, shape index: {}]
  %s9 = inlined_call_operand.vmem [shape: f32[3,1,8], index: 9, kind: input, shape index: {}]
  %s10 = inlined_call_operand.vmem [shape: f32[2,16,8], index: 10, kind: output, shape index: {}]
  %s11 = sld [smem:[#allocation0]]
  $region73: #{tpu_custom_call.1} parent=0
    _
  %s13 = ssub.s32 1, %s11
  %s14 = scalar_select 0, %s13, %s11
  loop: start=0, step=1, limit=4
  $region2: #{tpu_custom_call.1} parent=0 // loop_pre_header
    _
  $region3: #{tpu_custom_call.1} parent=0 // loop_header
    %s16 = sphi 0, %s20
    %p17 = scmp.ge.s32.totalorder %s16, 4
    %s26 = sphi 0, %s28
    %s29 = sphi 0, %s26
    %s30 = sphi 0, %s29
    %s46 = sphi 0, %s30
    %s52 = sphi 0, %s54
    %s55 = sphi 0, %s52
    %s56 = sphi 0, %s55
    %s72 = sphi 0, %s56
    %s76 = sphi 0, %s76
    %s78 = sphi 0, %s76
    %s79 = sphi 0, %s78
    %s93 = sphi 0, %s79
    %s97 = sphi 0, %s97
    %s99 = sphi 0, %s97
    %s100 = sphi 0, %s99
    %s114 = sphi 0, %s100
    %s118 = sphi 0, %s118
    %s120 = sphi 0, %s118
    %s121 = sphi 0, %s120
    %s135 = sphi 0, %s121
    %s139 = sphi 0, %s139
    %s141 = sphi 0, %s139
    %s142 = sphi 0, %s141
    %s156 = sphi 0, %s142
    %s160 = sphi 0, %s160
    %s162 = sphi 0, %s160
    %s163 = sphi 0, %s162
    %s177 = sphi 0, %s163
    %s181 = sphi 0, %s181
    %s183 = sphi 0, %s181
    %s184 = sphi 0, %s183
    %s198 = sphi 0, %s184
    %s202 = sphi 0, %s202
    %s204 = sphi 0, %s202
    %s205 = sphi 0, %s204
    %s219 = sphi 0, %s205
    %s223 = sphi 0, %s223
    %s225 = sphi 0, %s223
    %s226 = sphi 0, %s225
    %s240 = sphi 0, %s226
    %s246 = sphi 0, %s248
    %s249 = sphi 0, %s246
    %s250 = sphi 0, %s249
    %s266 = sphi 0, %s250
  $region4: #{tpu_custom_call.1} parent=0 // loop_header_branch
    %19 = sbr.rel (%p17) target = $region8
  $region5: #{tpu_custom_call.1} parent=0 // loop_body
    %s21 = ssub.s32 %s16, 1
    %s22 = ssub.s32 %s16, 2
    %s23 = sadd.s32 %s16, 1
    %s24 = ssub.s32 %s16, %s23
    %p25 = scmp.eq.s32.totalorder %s24, 0
    %s27 = sadd.s32 %s26, 1
    %s28 = scalar_select %p25, %s26, %s27
    %p31 = pneg %p25
    %p32 = scmp.eq.s32.totalorder %s16, 1
    %p33 = por %p31, %p32
    %p34 = scmp.ne.s32.totalorder %s26, %s29
    %p35 = scmp.eq.s32.totalorder %s16, 0
    %p36 = por %p34, %p35
    %p37 = scmp.ne.s32.totalorder %s26, %s29
    %p38 = scmp.eq.s32.totalorder %s21, 1
    %p39 = por %p37, %p38
    %p40 = scmp.ne.s32.totalorder %s29, %s30
    %p41 = scmp.eq.s32.totalorder %s21, 0
    %p42 = por %p40, %p41
    %p43 = scmp.ne.s32.totalorder %s29, %s30
    %p44 = scmp.eq.s32.totalorder %s22, 1
    %p45 = por %p43, %p44
    %p47 = scmp.ne.s32.totalorder %s30, %s46
    %p48 = scmp.eq.s32.totalorder %s22, 0
    %p49 = por %p47, %p48
    %s50 = ssub.s32 %s16, %s23
    %p51 = scmp.eq.s32.totalorder %s50, 0
    %s53 = sadd.s32 %s52, 1
    %s54 = scalar_select %p51, %s52, %s53
    %p57 = pneg %p51
    %p58 = scmp.eq.s32.totalorder %s16, 1
    %p59 = por %p57, %p58
    %p60 = scmp.ne.s32.totalorder %s52, %s55
    %p61 = scmp.eq.s32.totalorder %s16, 0
    %p62 = por %p60, %p61
    %p63 = scmp.ne.s32.totalorder %s52, %s55
    %p64 = scmp.eq.s32.totalorder %s21, 1
    %p65 = por %p63, %p64
    %p66 = scmp.ne.s32.totalorder %s55, %s56
    %p67 = scmp.eq.s32.totalorder %s21, 0
    %p68 = por %p66, %p67
    %p69 = scmp.ne.s32.totalorder %s55, %s56
    %p70 = scmp.eq.s32.totalorder %s22, 1
    %p71 = por %p69, %p70
    %p73 = scmp.ne.s32.totalorder %s56, %s72
    %p74 = scmp.eq.s32.totalorder %s22, 0
    %p75 = por %p73, %p74
    %s77 = sadd.s32 %s76, 1
    %p80 = scmp.eq.s32.totalorder %s16, 1
    %p81 = scmp.ne.s32.totalorder %s76, %s78
    %p82 = scmp.eq.s32.totalorder %s16, 0
    %p83 = por %p81, %p82
    %p84 = scmp.ne.s32.totalorder %s76, %s78
    %p85 = scmp.eq.s32.totalorder %s21, 1
    %p86 = por %p84, %p85
    %p87 = scmp.ne.s32.totalorder %s78, %s79
    %p88 = scmp.eq.s32.totalorder %s21, 0
    %p89 = por %p87, %p88
    %p90 = scmp.ne.s32.totalorder %s78, %s79
    %p91 = scmp.eq.s32.totalorder %s22, 1
    %p92 = por %p90, %p91
    %p94 = scmp.ne.s32.totalorder %s79, %s93
    %p95 = scmp.eq.s32.totalorder %s22, 0
    %p96 = por %p94, %p95
    %s98 = sadd.s32 %s97, 1
    %p101 = scmp.eq.s32.totalorder %s16, 1
    %p102 = scmp.ne.s32.totalorder %s97, %s99
    %p103 = scmp.eq.s32.totalorder %s16, 0
    %p104 = por %p102, %p103
    %p105 = scmp.ne.s32.totalorder %s97, %s99
    %p106 = scmp.eq.s32.totalorder %s21, 1
    %p107 = por %p105, %p106
    %p108 = scmp.ne.s32.totalorder %s99, %s100
    %p109 = scmp.eq.s32.totalorder %s21, 0
    %p110 = por %p108, %p109
    %p111 = scmp.ne.s32.totalorder %s99, %s100
    %p112 = scmp.eq.s32.totalorder %s22, 1
    %p113 = por %p111, %p112
    %p115 = scmp.ne.s32.totalorder %s100, %s114
    %p116 = scmp.eq.s32.totalorder %s22, 0
    %p117 = por %p115, %p116
    %s119 = sadd.s32 %s118, 1
    %p122 = scmp.eq.s32.totalorder %s16, 1
    %p123 = scmp.ne.s32.totalorder %s118, %s120
    %p124 = scmp.eq.s32.totalorder %s16, 0
    %p125 = por %p123, %p124
    %p126 = scmp.ne.s32.totalorder %s118, %s120
    %p127 = scmp.eq.s32.totalorder %s21, 1
    %p128 = por %p126, %p127
    %p129 = scmp.ne.s32.totalorder %s120, %s121
    %p130 = scmp.eq.s32.totalorder %s21, 0
    %p131 = por %p129, %p130
    %p132 = scmp.ne.s32.totalorder %s120, %s121
    %p133 = scmp.eq.s32.totalorder %s22, 1
    %p134 = por %p132, %p133
    %p136 = scmp.ne.s32.totalorder %s121, %s135
    %p137 = scmp.eq.s32.totalorder %s22, 0
    %p138 = por %p136, %p137
    %s140 = sadd.s32 %s139, 1
    %p143 = scmp.eq.s32.totalorder %s16, 1
    %p144 = scmp.ne.s32.totalorder %s139, %s141
    %p145 = scmp.eq.s32.totalorder %s16, 0
    %p146 = por %p144, %p145
    %p147 = scmp.ne.s32.totalorder %s139, %s141
    %p148 = scmp.eq.s32.totalorder %s21, 1
    %p149 = por %p147, %p148
    %p150 = scmp.ne.s32.totalorder %s141, %s142
    %p151 = scmp.eq.s32.totalorder %s21, 0
    %p152 = por %p150, %p151
    %p153 = scmp.ne.s32.totalorder %s141, %s142
    %p154 = scmp.eq.s32.totalorder %s22, 1
    %p155 = por %p153, %p154
    %p157 = scmp.ne.s32.totalorder %s142, %s156
    %p158 = scmp.eq.s32.totalorder %s22, 0
    %p159 = por %p157, %p158
    %s161 = sadd.s32 %s160, 1
    %p164 = scmp.eq.s32.totalorder %s16, 1
    %p165 = scmp.ne.s32.totalorder %s160, %s162
    %p166 = scmp.eq.s32.totalorder %s16, 0
    %p167 = por %p165, %p166
    %p168 = scmp.ne.s32.totalorder %s160, %s162
    %p169 = scmp.eq.s32.totalorder %s21, 1
    %p170 = por %p168, %p169
    %p171 = scmp.ne.s32.totalorder %s162, %s163
    %p172 = scmp.eq.s32.totalorder %s21, 0
    %p173 = por %p171, %p172
    %p174 = scmp.ne.s32.totalorder %s162, %s163
    %p175 = scmp.eq.s32.totalorder %s22, 1
    %p176 = por %p174, %p175
    %p178 = scmp.ne.s32.totalorder %s163, %s177
    %p179 = scmp.eq.s32.totalorder %s22, 0
    %p180 = por %p178, %p179
    %s182 = sadd.s32 %s181, 1
    %p185 = scmp.eq.s32.totalorder %s16, 1
    %p186 = scmp.ne.s32.totalorder %s181, %s183
    %p187 = scmp.eq.s32.totalorder %s16, 0
    %p188 = por %p186, %p187
    %p189 = scmp.ne.s32.totalorder %s181, %s183
    %p190 = scmp.eq.s32.totalorder %s21, 1
    %p191 = por %p189, %p190
    %p192 = scmp.ne.s32.totalorder %s183, %s184
    %p193 = scmp.eq.s32.totalorder %s21, 0
    %p194 = por %p192, %p193
    %p195 = scmp.ne.s32.totalorder %s183, %s184
    %p196 = scmp.eq.s32.totalorder %s22, 1
    %p197 = por %p195, %p196
    %p199 = scmp.ne.s32.totalorder %s184, %s198
    %p200 = scmp.eq.s32.totalorder %s22, 0
    %p201 = por %p199, %p200
    %s203 = sadd.s32 %s202, 1
    %p206 = scmp.eq.s32.totalorder %s16, 1
    %p207 = scmp.ne.s32.totalorder %s202, %s204
    %p208 = scmp.eq.s32.totalorder %s16, 0
    %p209 = por %p207, %p208
    %p210 = scmp.ne.s32.totalorder %s202, %s204
    %p211 = scmp.eq.s32.totalorder %s21, 1
    %p212 = por %p210, %p211
    %p213 = scmp.ne.s32.totalorder %s204, %s205
    %p214 = scmp.eq.s32.totalorder %s21, 0
    %p215 = por %p213, %p214
    %p216 = scmp.ne.s32.totalorder %s204, %s205
    %p217 = scmp.eq.s32.totalorder %s22, 1
    %p218 = por %p216, %p217
    %p220 = scmp.ne.s32.totalorder %s205, %s219
    %p221 = scmp.eq.s32.totalorder %s22, 0
    %p222 = por %p220, %p221
    %s224 = sadd.s32 %s223, 1
    %p227 = scmp.eq.s32.totalorder %s16, 1
    %p228 = scmp.ne.s32.totalorder %s223, %s225
    %p229 = scmp.eq.s32.totalorder %s16, 0
    %p230 = por %p228, %p229
    %p231 = scmp.ne.s32.totalorder %s223, %s225
    %p232 = scmp.eq.s32.totalorder %s21, 1
    %p233 = por %p231, %p232
    %p234 = scmp.ne.s32.totalorder %s225, %s226
    %p235 = scmp.eq.s32.totalorder %s21, 0
    %p236 = por %p234, %p235
    %p237 = scmp.ne.s32.totalorder %s225, %s226
    %p238 = scmp.eq.s32.totalorder %s22, 1
    %p239 = por %p237, %p238
    %p241 = scmp.ne.s32.totalorder %s226, %s240
    %p242 = scmp.eq.s32.totalorder %s22, 0
    %p243 = por %p241, %p242
    %s244 = ssub.s32 %s16, %s23
    %p245 = scmp.eq.s32.totalorder %s244, 0
    %s247 = sadd.s32 %s246, 1
    %s248 = scalar_select %p245, %s246, %s247
    %p251 = pneg %p245
    %p252 = scmp.eq.s32.totalorder %s16, 1
    %p253 = por %p251, %p252
    %p254 = scmp.ne.s32.totalorder %s246, %s249
    %p255 = scmp.eq.s32.totalorder %s16, 0
    %p256 = por %p254, %p255
    %p257 = scmp.ne.s32.totalorder %s246, %s249
    %p258 = scmp.eq.s32.totalorder %s21, 1
    %p259 = por %p257, %p258
    %p260 = scmp.ne.s32.totalorder %s249, %s250
    %p261 = scmp.eq.s32.totalorder %s21, 0
    %p262 = por %p260, %p261
    %p263 = scmp.ne.s32.totalorder %s249, %s250
    %p264 = scmp.eq.s32.totalorder %s22, 1
    %p265 = por %p263, %p264
    %p267 = scmp.ne.s32.totalorder %s250, %s266
    %p268 = scmp.eq.s32.totalorder %s22, 0
    %p269 = por %p267, %p268
    %p270 = scmp.le.s32.totalorder 1, %s16
    %p271 = scmp.lt.s32.totalorder %s16, 3
    %p272 = pnand %p270, %p271
    %p273 = pneg %p272
    // Predicated region
    $region9: #{tpu_custom_call.1} parent=5 // pred_check
      _
    $region10: #{tpu_custom_call.1} parent=5 // pred_check_branch
      %275 = sbr.rel (%p272) target = $region12
    $region11: #{tpu_custom_call.1} parent=5 // pred_region
      %s276 = ssub.s32 %s16, 1
      // Predicated region
      $region13: #{tpu_custom_call.1} parent=11 // pred_check
        %p277 = pneg %p89
      $region14: #{tpu_custom_call.1} parent=11 // pred_check_branch
        %279 = sbr.rel (%p277) target = $region16
      $region15: #{tpu_custom_call.1} parent=11 // pred_region
        _
      $region16: #{tpu_custom_call.1} parent=11 // pred_fallthru
        _
      // Predicated region
      $region17: #{tpu_custom_call.1} parent=11 // pred_check
        %p280 = pneg %p110
      $region18: #{tpu_custom_call.1} parent=11 // pred_check_branch
        %282 = sbr.rel (%p280) target = $region20
      $region19: #{tpu_custom_call.1} parent=11 // pred_region
        _
      $region20: #{tpu_custom_call.1} parent=11 // pred_fallthru
        _
      // Predicated region
      $region21: #{tpu_custom_call.1} parent=11 // pred_check
        %p283 = pneg %p131
      $region22: #{tpu_custom_call.1} parent=11 // pred_check_branch
        %285 = sbr.rel (%p283) target = $region24
      $region23: #{tpu_custom_call.1} parent=11 // pred_region
        _
      $region24: #{tpu_custom_call.1} parent=11 // pred_fallthru
        _
      // Predicated region
      $region25: #{tpu_custom_call.1} parent=11 // pred_check
        %p286 = pneg %p152
      $region26: #{tpu_custom_call.1} parent=11 // pred_check_branch
        %288 = sbr.rel (%p286) target = $region28
      $region27: #{tpu_custom_call.1} parent=11 // pred_region
        _
      $region28: #{tpu_custom_call.1} parent=11 // pred_fallthru
        _
      // Predicated region
      $region29: #{tpu_custom_call.1} parent=11 // pred_check
        %p289 = pneg %p173
      $region30: #{tpu_custom_call.1} parent=11 // pred_check_branch
        %291 = sbr.rel (%p289) target = $region32
      $region31: #{tpu_custom_call.1} parent=11 // pred_region
        _
      $region32: #{tpu_custom_call.1} parent=11 // pred_fallthru
        _
      // Predicated region
      $region33: #{tpu_custom_call.1} parent=11 // pred_check
        %p292 = pneg %p194
      $region34: #{tpu_custom_call.1} parent=11 // pred_check_branch
        %294 = sbr.rel (%p292) target = $region36
      $region35: #{tpu_custom_call.1} parent=11 // pred_region
        _
      $region36: #{tpu_custom_call.1} parent=11 // pred_fallthru
        _
      // Predicated region
      $region37: #{tpu_custom_call.1} parent=11 // pred_check
        %p295 = pneg %p215
      $region38: #{tpu_custom_call.1} parent=11 // pred_check_branch
        %297 = sbr.rel (%p295) target = $region40
      $region39: #{tpu_custom_call.1} parent=11 // pred_region
        _
      $region40: #{tpu_custom_call.1} parent=11 // pred_fallthru
        _
      // Predicated region
      $region41: #{tpu_custom_call.1} parent=11 // pred_check
        %p298 = pneg %p236
      $region42: #{tpu_custom_call.1} parent=11 // pred_check_branch
        %300 = sbr.rel (%p298) target = $region44
      $region43: #{tpu_custom_call.1} parent=11 // pred_region
        _
      $region44: #{tpu_custom_call.1} parent=11 // pred_fallthru
        _
    $region12: #{tpu_custom_call.1} parent=5 // pred_fallthru
      _
    %p301 = scmp.lt.s32.totalorder %s16, 2
    // Predicated region
    $region45: #{tpu_custom_call.1} parent=5 // pred_check
      %p302 = pneg %p301
    $region46: #{tpu_custom_call.1} parent=5 // pred_check_branch
      %304 = sbr.rel (%p302) target = $region48
    $region47: #{tpu_custom_call.1} parent=5 // pred_region
      // Predicated region
      $region49: #{tpu_custom_call.1} parent=47 // pred_check
        %p305 = pneg %p36
      $region50: #{tpu_custom_call.1} parent=47 // pred_check_branch
        %307 = sbr.rel (%p305) target = $region52
      $region51: #{tpu_custom_call.1} parent=47 // pred_region
        %p308 = scmp.lt.s32.totalorder %s16, 1
        %s309 = scalar_select %p308, %s16, 1
        %s310 = smul.addr %s309, 2
        %s311 = smul.addr %s310, 8
        %s312 = scalar_lea.vmem %s0, %s311
      $region52: #{tpu_custom_call.1} parent=47 // pred_fallthru
        _
      // Predicated region
      $region53: #{tpu_custom_call.1} parent=47 // pred_check
        %p313 = pneg %p62
      $region54: #{tpu_custom_call.1} parent=47 // pred_check_branch
        %315 = sbr.rel (%p313) target = $region56
      $region55: #{tpu_custom_call.1} parent=47 // pred_region
        %p316 = scmp.lt.s32.totalorder %s16, 1
        %s317 = scalar_select %p316, %s16, 1
        %s318 = smul.addr %s317, 2
        %s319 = smul.addr %s318, 8
        %s320 = scalar_lea.vmem %s1, %s319
      $region56: #{tpu_custom_call.1} parent=47 // pred_fallthru
        _
    $region48: #{tpu_custom_call.1} parent=5 // pred_fallthru
      _
    %p321 = scmp.le.s32.totalorder 1, %s16
    %p322 = scmp.lt.s32.totalorder %s16, 3
    %p323 = pnand %p321, %p322
    %p324 = pneg %p323
    // Predicated region
    $region57: #{tpu_custom_call.1} parent=5 // pred_check
      _
    $region58: #{tpu_custom_call.1} parent=5 // pred_check_branch
      %326 = sbr.rel (%p323) target = $region60
    $region59: #{tpu_custom_call.1} parent=5 // pred_region
      %s327 = ssub.s32 %s16, 1
      %p328 = scmp.lt.s32.totalorder %s21, 1
      %s329 = scalar_select %p328, %s21, 1
      %s330 = smul.addr %s329, 2
      %s331 = smul.addr %s330, 8
      %s332 = scalar_lea.vmem %s0, %s331
      %p333 = pneg %p42
      %p334 = pneg %p39
      %p335 = scmp.lt.s32.totalorder %s21, 1
      %s336 = scalar_select %p335, %s21, 1
      %s337 = smul.addr %s336, 2
      %s338 = smul.addr %s337, 8
      %s339 = scalar_lea.vmem %s1, %s338
      %p340 = pneg %p68
      %p341 = pneg %p65
      %p342 = pneg %p89
      %p343 = pneg %p86
      %p344 = pneg %p110
      %p345 = pneg %p107
      %p346 = pneg %p131
      %p347 = pneg %p128
      %p348 = pneg %p152
      %p349 = pneg %p149
      %p350 = pneg %p173
      %p351 = pneg %p170
      %p352 = pneg %p194
      %p353 = pneg %p191
      %p354 = pneg %p215
      %p355 = pneg %p212
      %p356 = pneg %p236
      %p357 = pneg %p233
      %p358 = pneg %p262
      %p359 = pneg %p259
      %p360 = scmp.lt.s32.totalorder %s21, 1
      %s361 = scalar_select %p360, %s21, 1
      %s362 = smul.addr %s361, 2
      %s363 = smul.addr %s362, 8
      %s364 = scalar_lea.vmem %s10, %s363
      %p365 = scmp.lt.s32.totalorder %s21, 1
      %s366 = scalar_select %p365, %s21, 1
      %s367 = smul.addr %s366, 2
      %s368 = smul.addr %s367, 8
      %s369 = scalar_lea.vmem %s0, %s368
      %p370 = scmp.lt.s32.totalorder %s21, 1
      %s371 = scalar_select %p370, %s21, 1
      %s372 = smul.addr %s371, 2
      %s373 = smul.addr %s372, 8
      %s374 = scalar_lea.vmem %s1, %s373
      %p375 = scmp.lt.s32.totalorder %s21, 1
      %s376 = scalar_select %p375, %s21, 1
      %s377 = smul.addr %s376, 2
      %s378 = smul.addr %s377, 8
      %s379 = scalar_lea.vmem %s10, %s378
      %vm380 = vcmask 64512
      %381 = vst.msk [vmem:[#allocation2] sm:$0xff] %vm380, 0.0
      %382 = vst.msk [vmem:[#allocation2 + $0x8] sm:$0xff] %vm380, 0.0
      %383 = vst.msk [vmem:[#allocation2 + $0x10] sm:$0xff] %vm380, 0.0
      %384 = vst.msk [vmem:[#allocation2 + $0x18] sm:$0xff] %vm380, 0.0
      %385 = vst.msk [vmem:[#allocation2 + $0x20] sm:$0xff] %vm380, 0.0
      %386 = vst.msk [vmem:[#allocation2 + $0x28] sm:$0xff] %vm380, 0.0
      %v387 = vld [vmem:[%s369] sm:$0xff]
      %v388 = vld [vmem:[%s369 + $0x8] sm:$0xff]
      %v389 = vld [vmem:[%s374] sm:$0xff]
      %v390 = vld [vmem:[%s374 + $0x8] sm:$0xff]
      %392 = vset.pattern.permute.xlu0 0
      %393 = vperm.xlu0 %392, %v389
      %v394 = vpop.permute.xlu0 %393
      %397 = vset.pattern.permute.xlu0 0
      %398 = vperm.xlu0 %397, %v390
      %v399 = vpop.permute.xlu0 %398
      %v401 = vmul.f32 %v387, %v394
      %v402 = vmul.f32 %v388, %v399
      %403 = vst.msk [vmem:[#allocation2 + $0x10] sm:$0xff] %vm380, %v401
      %404 = vst.msk [vmem:[#allocation2 + $0x18] sm:$0xff] %vm380, %v402
      %v405 = vld [vmem:[#allocation2 + $0x8] sm:$0xff]
      %v406 = vld [vmem:[#allocation2 + $0x10] sm:$0xff]
      %v407 = vld [vmem:[#allocation2 + $0x18] sm:$0xff]
      %v408 = vld [vmem:[#allocation2 + $0x20] sm:$0xff]
      %v409 = vld [vmem:[%s2] sm:$0x7]
      %v410 = vld [vmem:[%s3] sm:$0x1]
      %v412 = vperm.slane %v410, 0
      %v414 = vadd.f32 %v412, 0.0
      %v415 = vperm.slane %v409, 0
      %v416 = vmul.f32 %v405, %v415
      %v417 = vmul.f32 %v406, %v415
      %v418 = vmul.f32 %v407, %v415
      %v419 = vadd.f32 %v414, %v416
      %v420 = vadd.f32 %v414, %v417
      %v421 = vadd.f32 %v414, %v418
      %v422 = vperm.slane %v409, 1
      %v423 = vmul.f32 %v406, %v422
      %v424 = vmul.f32 %v407, %v422
      %vm427 = vcmask 1046528
      %v428 = vrot.slane %v423, 1
      %v429 = vrot.slane %v424, 1
      %v430 = vsel %vm427, %v428, %v429
      %v434 = vadd.f32 %v419, %v428
      %v435 = vadd.f32 %v420, %v430
      %v436 = vadd.f32 %v421, %v429
      %v437 = vperm.slane %v409, 2
      %v438 = vmul.f32 %v406, %v437
      %v439 = vmul.f32 %v407, %v437
      %v440 = vmul.f32 %v408, %v437
      %vm444 = vcmask 1045504
      %v445 = vrot.slane %v438, 2
      %v446 = vrot.slane %v439, 2
      %v447 = vsel %vm444, %v445, %v446
      %v448 = vrot.slane %v440, 2
      %v449 = vsel %vm444, %v446, %v448
      %v453 = vadd.f32 %v434, %v445
      %v454 = vadd.f32 %v435, %v447
      %v455 = vadd.f32 %v436, %v449
      %v456 = vld [vmem:[%s4] sm:$0x1]
      %v457 = vld [vmem:[%s5] sm:$0x1]
      %vm458 = vcmask 64519
      %v459 = vsel %vm458, %v453, 0.0
      %460 = vadd.xlane.f32.xlu0 %v459
      %v461 = vpop.xlane.xlu0 %460
      %v462 = vsel %vm380, %v454, 0.0
      %463 = vadd.xlane.f32.xlu0 %v462
      %v464 = vpop.xlane.xlu0 %463
      %vm465 = vcmask 63488
      %v466 = vsel %vm465, %v455, 0.0
      %467 = vadd.xlane.f32.xlu0 %v466
      %v468 = vpop.xlane.xlu0 %467
      %v469 = vrcp.pop 8.0
      %v470 = vmul.f32 8.0, %v469
      %v471 = vsub.f32 1.0, %v470
      %v472 = vmul.f32 %v469, %v471
      %v473 = vadd.f32 %v469, %v472
      %vm474 = vweird.f32 %v469
      %v475 = vsel %vm474, %v469, %v473
      %v476 = vmul.f32 %v461, %v475
      %v477 = vmul.f32 %v464, %v475
      %v478 = vmul.f32 %v468, %v475
      %v479 = vsub.f32 %v453, %v476
      %v480 = vsub.f32 %v454, %v477
      %v481 = vsub.f32 %v455, %v478
      %v482 = vmul.f32 %v479, %v479
      %v483 = vmul.f32 %v480, %v480
      %v484 = vmul.f32 %v481, %v481
      %v485 = vsel %vm458, %v482, 0.0
      %486 = vadd.xlane.f32.xlu0 %v485
      %v487 = vpop.xlane.xlu0 %486
      %v488 = vsel %vm380, %v483, 0.0
      %489 = vadd.xlane.f32.xlu0 %v488
      %v490 = vpop.xlane.xlu0 %489
      %v491 = vsel %vm465, %v484, 0.0
      %492 = vadd.xlane.f32.xlu0 %v491
      %v493 = vpop.xlane.xlu0 %492
      %v494 = vmul.f32 %v487, %v475
      %v495 = vmul.f32 %v490, %v475
      %v496 = vmul.f32 %v493, %v475
      %v497 = vadd.f32 %v494, 1e-05
      %v498 = vadd.f32 %v495, 1e-05
      %v499 = vadd.f32 %v496, 1e-05
      %v500 = vrsqrt.pop %v497
      %v501 = vmul.f32 %v500, %v497
      %v502 = vmul.f32 %v501, %v500
      %v503 = vmul.f32 0.5, %v502
      %v504 = vsub.f32 1.5, %v503
      %v505 = vmul.f32 %v500, %v504
      %vm506 = vweird.f32 %v497
      %vm507 = vweird.f32 %v500
      %vm508 = vmor %vm506, %vm507
      %v509 = vsel %vm508, %v500, %v505
      %v510 = vrsqrt.pop %v498
      %v511 = vmul.f32 %v510, %v498
      %v512 = vmul.f32 %v511, %v510
      %v513 = vmul.f32 0.5, %v512
      %v514 = vsub.f32 1.5, %v513
      %v515 = vmul.f32 %v510, %v514
      %vm516 = vweird.f32 %v498
      %vm517 = vweird.f32 %v510
      %vm518 = vmor %vm516, %vm517
      %v519 = vsel %vm518, %v510, %v515
      %v520 = vrsqrt.pop %v499
      %v521 = vmul.f32 %v520, %v499
      %v522 = vmul.f32 %v521, %v520
      %v523 = vmul.f32 0.5, %v522
      %v524 = vsub.f32 1.5, %v523
      %v525 = vmul.f32 %v520, %v524
      %vm526 = vweird.f32 %v499
      %vm527 = vweird.f32 %v520
      %vm528 = vmor %vm526, %vm527
      %v529 = vsel %vm528, %v520, %v525
      %v530 = vmul.f32 %v479, %v509
      %v531 = vmul.f32 %v480, %v519
      %v532 = vmul.f32 %v481, %v529
      %v534 = vperm.slane %v456, 0
      %v536 = vmul.f32 %v530, %v534
      %v537 = vmul.f32 %v531, %v534
      %v538 = vmul.f32 %v532, %v534
      %v540 = vperm.slane %v457, 0
      %v542 = vadd.f32 %v536, %v540
      %v543 = vadd.f32 %v537, %v540
      %v544 = vadd.f32 %v538, %v540
      %v545 = vmul.f32 %v542, 0.70710677
      %v546 = vmul.f32 %v543, 0.70710677
      %v547 = vmul.f32 %v544, 0.70710677
      %v548 = vand.u32 2147483647, %v545
      %v549 = vand.u32 2147483647, %v546
      %v550 = vand.u32 2147483647, %v547
      %v551 = vmul.f32 %v548, 0.3275911
      %v552 = vmul.f32 %v549, 0.3275911
      %v553 = vmul.f32 %v550, 0.3275911
      %v554 = vadd.f32 %v551, 1.0
      %v555 = vadd.f32 %v552, 1.0
      %v556 = vadd.f32 %v553, 1.0
      %v557 = vrcp.pop %v554
      %v558 = vmul.f32 %v554, %v557
      %v559 = vsub.f32 1.0, %v558
      %v560 = vmul.f32 %v557, %v559
      %v561 = vadd.f32 %v557, %v560
      %vm562 = vweird.f32 %v554
      %vm563 = vweird.f32 %v557
      %vm564 = vmor %vm562, %vm563
      %v565 = vsel %vm564, %v557, %v561
      %v566 = vand.u32 2147483647, %v554
      %vm567 = vcmp.eq.f32.partialorder %v566, 8.507059e+37
      %v568 = vand.u32 %v554, 2147483648
      %v569 = vor.u32 1.1754944e-38, %v568
      %v570 = vsel %vm567, %v569, %v565
      %v571 = vmul.f32 1.0, %v570
      %v572 = vrcp.pop %v555
      %v573 = vmul.f32 %v555, %v572
      %v574 = vsub.f32 1.0, %v573
      %v575 = vmul.f32 %v572, %v574
      %v576 = vadd.f32 %v572, %v575
      %vm577 = vweird.f32 %v555
      %vm578 = vweird.f32 %v572
      %vm579 = vmor %vm577, %vm578
      %v580 = vsel %vm579, %v572, %v576
      %v581 = vand.u32 2147483647, %v555
      %vm582 = vcmp.eq.f32.partialorder %v581, 8.507059e+37
      %v583 = vand.u32 %v555, 2147483648
      %v584 = vor.u32 1.1754944e-38, %v583
      %v585 = vsel %vm582, %v584, %v580
      %v586 = vmul.f32 1.0, %v585
      %v587 = vrcp.pop %v556
      %v588 = vmul.f32 %v556, %v587
      %v589 = vsub.f32 1.0, %v588
      %v590 = vmul.f32 %v587, %v589
      %v591 = vadd.f32 %v587, %v590
      %vm592 = vweird.f32 %v556
      %vm593 = vweird.f32 %v587
      %vm594 = vmor %vm592, %vm593
      %v595 = vsel %vm594, %v587, %v591
      %v596 = vand.u32 2147483647, %v556
      %vm597 = vcmp.eq.f32.partialorder %v596, 8.507059e+37
      %v598 = vand.u32 %v556, 2147483648
      %v599 = vor.u32 1.1754944e-38, %v598
      %v600 = vsel %vm597, %v599, %v595
      %v601 = vmul.f32 1.0, %v600
      %v602 = vmul.f32 %v571, 1.0614054
      %v603 = vmul.f32 %v586, 1.0614054
      %v604 = vmul.f32 %v601, 1.0614054
      %v605 = vadd.f32 %v602, -1.4531521
      %v606 = vadd.f32 %v603, -1.4531521
      %v607 = vadd.f32 %v604, -1.4531521
      %v608 = vmul.f32 %v571, %v605
      %v609 = vmul.f32 %v586, %v606
      %v610 = vmul.f32 %v601, %v607
      %v611 = vadd.f32 %v608, 1.4214138
      %v612 = vadd.f32 %v609, 1.4214138
      %v613 = vadd.f32 %v610, 1.4214138
      %v614 = vmul.f32 %v571, %v611
      %v615 = vmul.f32 %v586, %v612
      %v616 = vmul.f32 %v601, %v613
      %v617 = vadd.f32 %v614, -0.28449672
      %v618 = vadd.f32 %v615, -0.28449672
      %v619 = vadd.f32 %v616, -0.28449672
      %v620 = vmul.f32 %v571, %v617
      %v621 = vmul.f32 %v586, %v618
      %v622 = vmul.f32 %v601, %v619
      %v623 = vadd.f32 %v620, 0.2548296
      %v624 = vadd.f32 %v621, 0.2548296
      %v625 = vadd.f32 %v622, 0.2548296
      %v626 = vmul.f32 %v571, %v623
      %v627 = vmul.f32 %v586, %v624
      %v628 = vmul.f32 %v601, %v625
      %v629 = vsub.f32 0.0, %v548
      %v630 = vsub.f32 0.0, %v549
      %v631 = vsub.f32 0.0, %v550
      %v632 = vmul.f32 %v629, %v548
      %v633 = vmul.f32 %v630, %v549
      %v634 = vmul.f32 %v631, %v550
      %v635 = vmul.f32 %v632, 1.442695
      %v636 = vpow.pop %v635
      %v637 = vmul.f32 %v633, 1.442695
      %v638 = vpow.pop %v637
      %v639 = vmul.f32 %v634, 1.442695
      %v640 = vpow.pop %v639
      %v641 = vmul.f32 %v626, %v636
      %v642 = vmul.f32 %v627, %v638
      %v643 = vmul.f32 %v628, %v640
      %v644 = vsub.f32 1.0, %v641
      %v645 = vsub.f32 1.0, %v642
      %v646 = vsub.f32 1.0, %v643
      %vm647 = vcmp.ge.f32.partialorder %v545, 0.0
      %vm648 = vcmp.ge.f32.partialorder %v546, 0.0
      %vm649 = vcmp.ge.f32.partialorder %v547, 0.0
      %v650 = vsub.f32 0.0, %v644
      %v651 = vsub.f32 0.0, %v645
      %v652 = vsub.f32 0.0, %v646
      %v653 = vsel %vm647, %v644, %v650
      %v654 = vsel %vm648, %v645, %v651
      %v655 = vsel %vm649, %v646, %v652
      %v656 = vmul.f32 %v542, 0.5
      %v657 = vmul.f32 %v543, 0.5
      %v658 = vmul.f32 %v544, 0.5
      %v659 = vadd.f32 %v653, 1.0
      %v660 = vadd.f32 %v654, 1.0
      %v661 = vadd.f32 %v655, 1.0
      %v662 = vmul.f32 %v656, %v659
      %v663 = vmul.f32 %v657, %v660
      %v664 = vmul.f32 %v658, %v661
      %v665 = vld [vmem:[%s6] sm:$0xff]
      %v666 = vld [vmem:[%s7] sm:$0x1]
      %v668 = vperm.slane %v666, 0
      %vm673 = vcmask 1040384
      %v674 = vrot.slane %v662, 7
      %v675 = vrot.slane %v663, 7
      %v676 = vsel %vm673, %v674, %v675
      %v677 = vrot.slane %v664, 7
      %v678 = vsel %vm673, %v675, %v677
      %v679 = vsel %vm380, %v676, 0
      %v681 = vsel %vm380, %v678, 0
      %683 = vmatpush.msra.mxu0 0.0
      %684 = vmatpush.msra.mxu0 0.0
      %685 = vmatpush.msra.mxu0 0.0
      %686 = vmatpush.msra.mxu0 0.0
      %687 = vmatpush.msra.mxu0 0.0
      %688 = vmatpush.msra.mxu0 0.0
      %689 = vmatpush.msra.mxu0 0.0
      %690 = vmatpush.msra.mxu0 0.0
      %691 = vmatpush.msra.mxu0 0.0
      %692 = vmatpush.msra.mxu0 0.0
      %693 = vmatpush.msra.mxu0 0.0
      %694 = vmatpush.msra.mxu0 0.0
      %695 = vmatpush.msra.mxu0 0.0
      %696 = vmatpush.msra.mxu0 0.0
      %697 = vmatpush.msra.mxu0 0.0
      %698 = vmatpush.msra.mxu0 %v665
      %699 = vmatmul.f32.gmra.mxu0 %v679
      %v700 = vpop.f32.mrf.mxu0
      %v701 = vadd.f32 %v668, %v700
      %702 = vmatmul.f32.gmra.mxu0 %v681
      %v703 = vpop.f32.mrf.mxu0
      %v704 = vadd.f32 %v668, %v703
      %705 = vdwg.mxu0
      %v706 = vld [vmem:[%s8] sm:$0x1]
      %v707 = vld [vmem:[%s9] sm:$0x1]
      %v708 = vsel %vm380, %v701, 0.0
      %709 = vadd.xlane.f32.xlu0 %v708
      %v710 = vpop.xlane.xlu0 %709
      %v711 = vsel %vm380, %v704, 0.0
      %712 = vadd.xlane.f32.xlu0 %v711
      %v713 = vpop.xlane.xlu0 %712
      %v714 = vmul.f32 %v710, %v475
      %v715 = vmul.f32 %v713, %v475
      %v716 = vsub.f32 %v701, %v714
      %v717 = vsub.f32 %v704, %v715
      %v718 = vmul.f32 %v716, %v716
      %v719 = vmul.f32 %v717, %v717
      %v720 = vsel %vm380, %v718, 0.0
      %721 = vadd.xlane.f32.xlu0 %v720
      %v722 = vpop.xlane.xlu0 %721
      %v723 = vsel %vm380, %v719, 0.0
      %724 = vadd.xlane.f32.xlu0 %v723
      %v725 = vpop.xlane.xlu0 %724
      %v726 = vmul.f32 %v722, %v475
      %v727 = vmul.f32 %v725, %v475
      %v728 = vadd.f32 %v726, 1e-05
      %v729 = vadd.f32 %v727, 1e-05
      %v730 = vrsqrt.pop %v728
      %v731 = vmul.f32 %v730, %v728
      %v732 = vmul.f32 %v731, %v730
      %v733 = vmul.f32 0.5, %v732
      %v734 = vsub.f32 1.5, %v733
      %v735 = vmul.f32 %v730, %v734
      %vm736 = vweird.f32 %v728
      %vm737 = vweird.f32 %v730
      %vm738 = vmor %vm736, %vm737
      %v739 = vsel %vm738, %v730, %v735
      %v740 = vrsqrt.pop %v729
      %v741 = vmul.f32 %v740, %v729
      %v742 = vmul.f32 %v741, %v740
      %v743 = vmul.f32 0.5, %v742
      %v744 = vsub.f32 1.5, %v743
      %v745 = vmul.f32 %v740, %v744
      %vm746 = vweird.f32 %v729
      %vm747 = vweird.f32 %v740
      %vm748 = vmor %vm746, %vm747
      %v749 = vsel %vm748, %v740, %v745
      %v750 = vmul.f32 %v716, %v739
      %v751 = vmul.f32 %v717, %v749
      %v753 = vperm.slane %v706, 0
      %v755 = vmul.f32 %v750, %v753
      %v756 = vmul.f32 %v751, %v753
      %v758 = vperm.slane %v707, 0
      %v760 = vadd.f32 %v755, %v758
      %v761 = vadd.f32 %v756, %v758
      %v762 = vmul.f32 %v760, 0.70710677
      %v763 = vmul.f32 %v761, 0.70710677
      %v764 = vand.u32 2147483647, %v762
      %v765 = vand.u32 2147483647, %v763
      %v766 = vmul.f32 %v764, 0.3275911
      %v767 = vmul.f32 %v765, 0.3275911
      %v768 = vadd.f32 %v766, 1.0
      %v769 = vadd.f32 %v767, 1.0
      %v770 = vrcp.pop %v768
      %v771 = vmul.f32 %v768, %v770
      %v772 = vsub.f32 1.0, %v771
      %v773 = vmul.f32 %v770, %v772
      %v774 = vadd.f32 %v770, %v773
      %vm775 = vweird.f32 %v768
      %vm776 = vweird.f32 %v770
      %vm777 = vmor %vm775, %vm776
      %v778 = vsel %vm777, %v770, %v774
      %v779 = vand.u32 2147483647, %v768
      %vm780 = vcmp.eq.f32.partialorder %v779, 8.507059e+37
      %v781 = vand.u32 %v768, 2147483648
      %v782 = vor.u32 1.1754944e-38, %v781
      %v783 = vsel %vm780, %v782, %v778
      %v784 = vmul.f32 1.0, %v783
      %v785 = vrcp.pop %v769
      %v786 = vmul.f32 %v769, %v785
      %v787 = vsub.f32 1.0, %v786
      %v788 = vmul.f32 %v785, %v787
      %v789 = vadd.f32 %v785, %v788
      %vm790 = vweird.f32 %v769
      %vm791 = vweird.f32 %v785
      %vm792 = vmor %vm790, %vm791
      %v793 = vsel %vm792, %v785, %v789
      %v794 = vand.u32 2147483647, %v769
      %vm795 = vcmp.eq.f32.partialorder %v794, 8.507059e+37
      %v796 = vand.u32 %v769, 2147483648
      %v797 = vor.u32 1.1754944e-38, %v796
      %v798 = vsel %vm795, %v797, %v793
      %v799 = vmul.f32 1.0, %v798
      %v800 = vmul.f32 %v784, 1.0614054
      %v801 = vmul.f32 %v799, 1.0614054
      %v802 = vadd.f32 %v800, -1.4531521
      %v803 = vadd.f32 %v801, -1.4531521
      %v804 = vmul.f32 %v784, %v802
      %v805 = vmul.f32 %v799, %v803
      %v806 = vadd.f32 %v804, 1.4214138
      %v807 = vadd.f32 %v805, 1.4214138
      %v808 = vmul.f32 %v784, %v806
      %v809 = vmul.f32 %v799, %v807
      %v810 = vadd.f32 %v808, -0.28449672
      %v811 = vadd.f32 %v809, -0.28449672
      %v812 = vmul.f32 %v784, %v810
      %v813 = vmul.f32 %v799, %v811
      %v814 = vadd.f32 %v812, 0.2548296
      %v815 = vadd.f32 %v813, 0.2548296
      %v816 = vmul.f32 %v784, %v814
      %v817 = vmul.f32 %v799, %v815
      %v818 = vsub.f32 0.0, %v764
      %v819 = vsub.f32 0.0, %v765
      %v820 = vmul.f32 %v818, %v764
      %v821 = vmul.f32 %v819, %v765
      %v822 = vmul.f32 %v820, 1.442695
      %v823 = vpow.pop %v822
      %v824 = vmul.f32 %v821, 1.442695
      %v825 = vpow.pop %v824
      %v826 = vmul.f32 %v816, %v823
      %v827 = vmul.f32 %v817, %v825
      %v828 = vsub.f32 1.0, %v826
      %v829 = vsub.f32 1.0, %v827
      %vm830 = vcmp.ge.f32.partialorder %v762, 0.0
      %vm831 = vcmp.ge.f32.partialorder %v763, 0.0
      %v832 = vsub.f32 0.0, %v828
      %v833 = vsub.f32 0.0, %v829
      %v834 = vsel %vm830, %v828, %v832
      %v835 = vsel %vm831, %v829, %v833
      %v836 = vmul.f32 %v760, 0.5
      %v837 = vmul.f32 %v761, 0.5
      %v838 = vadd.f32 %v834, 1.0
      %v839 = vadd.f32 %v835, 1.0
      %v840 = vmul.f32 %v836, %v838
      %v841 = vmul.f32 %v837, %v839
      %v842 = vadd.f32 %v387, %v840
      %v843 = vadd.f32 %v388, %v841
      %v844 = vmul.f32 %v842, %v394
      %v845 = vmul.f32 %v843, %v399
      %846 = vst.msk [vmem:[#allocation2 + $0x10] sm:$0xff] %vm380, %v844
      %847 = vst.msk [vmem:[#allocation2 + $0x18] sm:$0xff] %vm380, %v845
      %v848 = vld [vmem:[#allocation2 + $0x8] sm:$0xff]
      %v849 = vld [vmem:[#allocation2 + $0x10] sm:$0xff]
      %v850 = vld [vmem:[#allocation2 + $0x18] sm:$0xff]
      %v851 = vld [vmem:[#allocation2 + $0x20] sm:$0xff]
      %s852 = scalar_lea.vmem %s2, 4
      %v853 = vld [vmem:[%s852] sm:$0x7]
      %s854 = scalar_lea.vmem %s3, 1
      %v855 = vld [vmem:[%s854] sm:$0x1]
      %v857 = vperm.slane %v855, 0
      %v859 = vadd.f32 %v857, 0.0
      %v860 = vperm.slane %v853, 0
      %v861 = vmul.f32 %v848, %v860
      %v862 = vmul.f32 %v849, %v860
      %v863 = vmul.f32 %v850, %v860
      %v864 = vadd.f32 %v859, %v861
      %v865 = vadd.f32 %v859, %v862
      %v866 = vadd.f32 %v859, %v863
      %v867 = vperm.slane %v853, 1
      %v868 = vmul.f32 %v849, %v867
      %v869 = vmul.f32 %v850, %v867
      %vm872 = vcmask 1044480
      %v873 = vrot.slane %v868, 3
      %v874 = vrot.slane %v869, 3
      %v875 = vsel %vm872, %v873, %v874
      %v879 = vadd.f32 %v864, %v873
      %v880 = vadd.f32 %v865, %v875
      %v881 = vadd.f32 %v866, %v874
      %v882 = vperm.slane %v853, 2
      %v883 = vmul.f32 %v849, %v882
      %v884 = vmul.f32 %v850, %v882
      %v885 = vmul.f32 %v851, %v882
      %vm889 = vcmask 1041408
      %v890 = vrot.slane %v883, 6
      %v891 = vrot.slane %v884, 6
      %v892 = vsel %vm889, %v890, %v891
      %v893 = vrot.slane %v885, 6
      %v894 = vsel %vm889, %v891, %v893
      %v898 = vadd.f32 %v879, %v890
      %v899 = vadd.f32 %v880, %v892
      %v900 = vadd.f32 %v881, %v894
      %s901 = scalar_lea.vmem %s4, 1
      %v902 = vld [vmem:[%s901] sm:$0x1]
      %s903 = scalar_lea.vmem %s5, 1
      %v904 = vld [vmem:[%s903] sm:$0x1]
      %vm905 = vcmask 64517
      %v906 = vsel %vm905, %v898, 0.0
      %907 = vadd.xlane.f32.xlu0 %v906
      %v908 = vpop.xlane.xlu0 %907
      %v909 = vsel %vm380, %v899, 0.0
      %910 = vadd.xlane.f32.xlu0 %v909
      %v911 = vpop.xlane.xlu0 %910
      %vm912 = vcmask 61440
      %v913 = vsel %vm912, %v900, 0.0
      %914 = vadd.xlane.f32.xlu0 %v913
      %v915 = vpop.xlane.xlu0 %914
      %v916 = vmul.f32 %v908, %v475
      %v917 = vmul.f32 %v911, %v475
      %v918 = vmul.f32 %v915, %v475
      %v919 = vsub.f32 %v898, %v916
      %v920 = vsub.f32 %v899, %v917
      %v921 = vsub.f32 %v900, %v918
      %v922 = vmul.f32 %v919, %v919
      %v923 = vmul.f32 %v920, %v920
      %v924 = vmul.f32 %v921, %v921
      %v925 = vsel %vm905, %v922, 0.0
      %926 = vadd.xlane.f32.xlu0 %v925
      %v927 = vpop.xlane.xlu0 %926
      %v928 = vsel %vm380, %v923, 0.0
      %929 = vadd.xlane.f32.xlu0 %v928
      %v930 = vpop.xlane.xlu0 %929
      %v931 = vsel %vm912, %v924, 0.0
      %932 = vadd.xlane.f32.xlu0 %v931
      %v933 = vpop.xlane.xlu0 %932
      %v934 = vmul.f32 %v927, %v475
      %v935 = vmul.f32 %v930, %v475
      %v936 = vmul.f32 %v933, %v475
      %v937 = vadd.f32 %v934, 1e-05
      %v938 = vadd.f32 %v935, 1e-05
      %v939 = vadd.f32 %v936, 1e-05
      %v940 = vrsqrt.pop %v937
      %v941 = vmul.f32 %v940, %v937
      %v942 = vmul.f32 %v941, %v940
      %v943 = vmul.f32 0.5, %v942
      %v944 = vsub.f32 1.5, %v943
      %v945 = vmul.f32 %v940, %v944
      %vm946 = vweird.f32 %v937
      %vm947 = vweird.f32 %v940
      %vm948 = vmor %vm946, %vm947
      %v949 = vsel %vm948, %v940, %v945
      %v950 = vrsqrt.pop %v938
      %v951 = vmul.f32 %v950, %v938
      %v952 = vmul.f32 %v951, %v950
      %v953 = vmul.f32 0.5, %v952
      %v954 = vsub.f32 1.5, %v953
      %v955 = vmul.f32 %v950, %v954
      %vm956 = vweird.f32 %v938
      %vm957 = vweird.f32 %v950
      %vm958 = vmor %vm956, %vm957
      %v959 = vsel %vm958, %v950, %v955
      %v960 = vrsqrt.pop %v939
      %v961 = vmul.f32 %v960, %v939
      %v962 = vmul.f32 %v961, %v960
      %v963 = vmul.f32 0.5, %v962
      %v964 = vsub.f32 1.5, %v963
      %v965 = vmul.f32 %v960, %v964
      %vm966 = vweird.f32 %v939
      %vm967 = vweird.f32 %v960
      %vm968 = vmor %vm966, %vm967
      %v969 = vsel %vm968, %v960, %v965
      %v970 = vmul.f32 %v919, %v949
      %v971 = vmul.f32 %v920, %v959
      %v972 = vmul.f32 %v921, %v969
      %v974 = vperm.slane %v902, 0
      %v976 = vmul.f32 %v970, %v974
      %v977 = vmul.f32 %v971, %v974
      %v978 = vmul.f32 %v972, %v974
      %v980 = vperm.slane %v904, 0
      %v982 = vadd.f32 %v976, %v980
      %v983 = vadd.f32 %v977, %v980
      %v984 = vadd.f32 %v978, %v980
      %v985 = vmul.f32 %v982, 0.70710677
      %v986 = vmul.f32 %v983, 0.70710677
      %v987 = vmul.f32 %v984, 0.70710677
      %v988 = vand.u32 2147483647, %v985
      %v989 = vand.u32 2147483647, %v986
      %v990 = vand.u32 2147483647, %v987
      %v991 = vmul.f32 %v988, 0.3275911
      %v992 = vmul.f32 %v989, 0.3275911
      %v993 = vmul.f32 %v990, 0.3275911
      %v994 = vadd.f32 %v991, 1.0
      %v995 = vadd.f32 %v992, 1.0
      %v996 = vadd.f32 %v993, 1.0
      %v997 = vrcp.pop %v994
      %v998 = vmul.f32 %v994, %v997
      %v999 = vsub.f32 1.0, %v998
      %v1000 = vmul.f32 %v997, %v999
      %v1001 = vadd.f32 %v997, %v1000
      %vm1002 = vweird.f32 %v994
      %vm1003 = vweird.f32 %v997
      %vm1004 = vmor %vm1002, %vm1003
      %v1005 = vsel %vm1004, %v997, %v1001
      %v1006 = vand.u32 2147483647, %v994
      %vm1007 = vcmp.eq.f32.partialorder %v1006, 8.507059e+37
      %v1008 = vand.u32 %v994, 2147483648
      %v1009 = vor.u32 1.1754944e-38, %v1008
      %v1010 = vsel %vm1007, %v1009, %v1005
      %v1011 = vmul.f32 1.0, %v1010
      %v1012 = vrcp.pop %v995
      %v1013 = vmul.f32 %v995, %v1012
      %v1014 = vsub.f32 1.0, %v1013
      %v1015 = vmul.f32 %v1012, %v1014
      %v1016 = vadd.f32 %v1012, %v1015
      %vm1017 = vweird.f32 %v995
      %vm1018 = vweird.f32 %v1012
      %vm1019 = vmor %vm1017, %vm1018
      %v1020 = vsel %vm1019, %v1012, %v1016
      %v1021 = vand.u32 2147483647, %v995
      %vm1022 = vcmp.eq.f32.partialorder %v1021, 8.507059e+37
      %v1023 = vand.u32 %v995, 2147483648
      %v1024 = vor.u32 1.1754944e-38, %v1023
      %v1025 = vsel %vm1022, %v1024, %v1020
      %v1026 = vmul.f32 1.0, %v1025
      %v1027 = vrcp.pop %v996
      %v1028 = vmul.f32 %v996, %v1027
      %v1029 = vsub.f32 1.0, %v1028
      %v1030 = vmul.f32 %v1027, %v1029
      %v1031 = vadd.f32 %v1027, %v1030
      %vm1032 = vweird.f32 %v996
      %vm1033 = vweird.f32 %v1027
      %vm1034 = vmor %vm1032, %vm1033
      %v1035 = vsel %vm1034, %v1027, %v1031
      %v1036 = vand.u32 2147483647, %v996
      %vm1037 = vcmp.eq.f32.partialorder %v1036, 8.507059e+37
      %v1038 = vand.u32 %v996, 2147483648
      %v1039 = vor.u32 1.1754944e-38, %v1038
      %v1040 = vsel %vm1037, %v1039, %v1035
      %v1041 = vmul.f32 1.0, %v1040
      %v1042 = vmul.f32 %v1011, 1.0614054
      %v1043 = vmul.f32 %v1026, 1.0614054
      %v1044 = vmul.f32 %v1041, 1.0614054
      %v1045 = vadd.f32 %v1042, -1.4531521
      %v1046 = vadd.f32 %v1043, -1.4531521
      %v1047 = vadd.f32 %v1044, -1.4531521
      %v1048 = vmul.f32 %v1011, %v1045
      %v1049 = vmul.f32 %v1026, %v1046
      %v1050 = vmul.f32 %v1041, %v1047
      %v1051 = vadd.f32 %v1048, 1.4214138
      %v1052 = vadd.f32 %v1049, 1.4214138
      %v1053 = vadd.f32 %v1050, 1.4214138
      %v1054 = vmul.f32 %v1011, %v1051
      %v1055 = vmul.f32 %v1026, %v1052
      %v1056 = vmul.f32 %v1041, %v1053
      %v1057 = vadd.f32 %v1054, -0.28449672
      %v1058 = vadd.f32 %v1055, -0.28449672
      %v1059 = vadd.f32 %v1056, -0.28449672
      %v1060 = vmul.f32 %v1011, %v1057
      %v1061 = vmul.f32 %v1026, %v1058
      %v1062 = vmul.f32 %v1041, %v1059
      %v1063 = vadd.f32 %v1060, 0.2548296
      %v1064 = vadd.f32 %v1061, 0.2548296
      %v1065 = vadd.f32 %v1062, 0.2548296
      %v1066 = vmul.f32 %v1011, %v1063
      %v1067 = vmul.f32 %v1026, %v1064
      %v1068 = vmul.f32 %v1041, %v1065
      %v1069 = vsub.f32 0.0, %v988
      %v1070 = vsub.f32 0.0, %v989
      %v1071 = vsub.f32 0.0, %v990
      %v1072 = vmul.f32 %v1069, %v988
      %v1073 = vmul.f32 %v1070, %v989
      %v1074 = vmul.f32 %v1071, %v990
      %v1075 = vmul.f32 %v1072, 1.442695
      %v1076 = vpow.pop %v1075
      %v1077 = vmul.f32 %v1073, 1.442695
      %v1078 = vpow.pop %v1077
      %v1079 = vmul.f32 %v1074, 1.442695
      %v1080 = vpow.pop %v1079
      %v1081 = vmul.f32 %v1066, %v1076
      %v1082 = vmul.f32 %v1067, %v1078
      %v1083 = vmul.f32 %v1068, %v1080
      %v1084 = vsub.f32 1.0, %v1081
      %v1085 = vsub.f32 1.0, %v1082
      %v1086 = vsub.f32 1.0, %v1083
      %vm1087 = vcmp.ge.f32.partialorder %v985, 0.0
      %vm1088 = vcmp.ge.f32.partialorder %v986, 0.0
      %vm1089 = vcmp.ge.f32.partialorder %v987, 0.0
      %v1090 = vsub.f32 0.0, %v1084
      %v1091 = vsub.f32 0.0, %v1085
      %v1092 = vsub.f32 0.0, %v1086
      %v1093 = vsel %vm1087, %v1084, %v1090
      %v1094 = vsel %vm1088, %v1085, %v1091
      %v1095 = vsel %vm1089, %v1086, %v1092
      %v1096 = vmul.f32 %v982, 0.5
      %v1097 = vmul.f32 %v983, 0.5
      %v1098 = vmul.f32 %v984, 0.5
      %v1099 = vadd.f32 %v1093, 1.0
      %v1100 = vadd.f32 %v1094, 1.0
      %v1101 = vadd.f32 %v1095, 1.0
      %v1102 = vmul.f32 %v1096, %v1099
      %v1103 = vmul.f32 %v1097, %v1100
      %v1104 = vmul.f32 %v1098, %v1101
      %s1105 = scalar_lea.vmem %s6, 8
      %v1106 = vld [vmem:[%s1105] sm:$0xff]
      %s1107 = scalar_lea.vmem %s7, 1
      %v1108 = vld [vmem:[%s1107] sm:$0x1]
      %v1110 = vperm.slane %v1108, 0
      %vm1115 = vcmask 1042432
      %v1116 = vrot.slane %v1102, 5
      %v1117 = vrot.slane %v1103, 5
      %v1118 = vsel %vm1115, %v1116, %v1117
      %v1119 = vrot.slane %v1104, 5
      %v1120 = vsel %vm1115, %v1117, %v1119
      %v1121 = vsel %vm380, %v1118, 0
      %v1123 = vsel %vm380, %v1120, 0
      %1125 = vmatpush.msra.mxu0 0.0
      %1126 = vmatpush.msra.mxu0 0.0
      %1127 = vmatpush.msra.mxu0 0.0
      %1128 = vmatpush.msra.mxu0 0.0
      %1129 = vmatpush.msra.mxu0 0.0
      %1130 = vmatpush.msra.mxu0 0.0
      %1131 = vmatpush.msra.mxu0 0.0
      %1132 = vmatpush.msra.mxu0 0.0
      %1133 = vmatpush.msra.mxu0 0.0
      %1134 = vmatpush.msra.mxu0 0.0
      %1135 = vmatpush.msra.mxu0 0.0
      %1136 = vmatpush.msra.mxu0 0.0
      %1137 = vmatpush.msra.mxu0 0.0
      %1138 = vmatpush.msra.mxu0 0.0
      %1139 = vmatpush.msra.mxu0 0.0
      %1140 = vmatpush.msra.mxu0 %v1106
      %1141 = vmatmul.f32.gmra.mxu0 %v1121
      %v1142 = vpop.f32.mrf.mxu0
      %v1143 = vadd.f32 %v1110, %v1142
      %1144 = vmatmul.f32.gmra.mxu0 %v1123
      %v1145 = vpop.f32.mrf.mxu0
      %v1146 = vadd.f32 %v1110, %v1145
      %1147 = vdwg.mxu0
      %s1148 = scalar_lea.vmem %s8, 1
      %v1149 = vld [vmem:[%s1148] sm:$0x1]
      %s1150 = scalar_lea.vmem %s9, 1
      %v1151 = vld [vmem:[%s1150] sm:$0x1]
      %v1152 = vsel %vm380, %v1143, 0.0
      %1153 = vadd.xlane.f32.xlu0 %v1152
      %v1154 = vpop.xlane.xlu0 %1153
      %v1155 = vsel %vm380, %v1146, 0.0
      %1156 = vadd.xlane.f32.xlu0 %v1155
      %v1157 = vpop.xlane.xlu0 %1156
      %v1158 = vmul.f32 %v1154, %v475
      %v1159 = vmul.f32 %v1157, %v475
      %v1160 = vsub.f32 %v1143, %v1158
      %v1161 = vsub.f32 %v1146, %v1159
      %v1162 = vmul.f32 %v1160, %v1160
      %v1163 = vmul.f32 %v1161, %v1161
      %v1164 = vsel %vm380, %v1162, 0.0
      %1165 = vadd.xlane.f32.xlu0 %v1164
      %v1166 = vpop.xlane.xlu0 %1165
      %v1167 = vsel %vm380, %v1163, 0.0
      %1168 = vadd.xlane.f32.xlu0 %v1167
      %v1169 = vpop.xlane.xlu0 %1168
      %v1170 = vmul.f32 %v1166, %v475
      %v1171 = vmul.f32 %v1169, %v475
      %v1172 = vadd.f32 %v1170, 1e-05
      %v1173 = vadd.f32 %v1171, 1e-05
      %v1174 = vrsqrt.pop %v1172
      %v1175 = vmul.f32 %v1174, %v1172
      %v1176 = vmul.f32 %v1175, %v1174
      %v1177 = vmul.f32 0.5, %v1176
      %v1178 = vsub.f32 1.5, %v1177
      %v1179 = vmul.f32 %v1174, %v1178
      %vm1180 = vweird.f32 %v1172
      %vm1181 = vweird.f32 %v1174
      %vm1182 = vmor %vm1180, %vm1181
      %v1183 = vsel %vm1182, %v1174, %v1179
      %v1184 = vrsqrt.pop %v1173
      %v1185 = vmul.f32 %v1184, %v1173
      %v1186 = vmul.f32 %v1185, %v1184
      %v1187 = vmul.f32 0.5, %v1186
      %v1188 = vsub.f32 1.5, %v1187
      %v1189 = vmul.f32 %v1184, %v1188
      %vm1190 = vweird.f32 %v1173
      %vm1191 = vweird.f32 %v1184
      %vm1192 = vmor %vm1190, %vm1191
      %v1193 = vsel %vm1192, %v1184, %v1189
      %v1194 = vmul.f32 %v1160, %v1183
      %v1195 = vmul.f32 %v1161, %v1193
      %v1197 = vperm.slane %v1149, 0
      %v1199 = vmul.f32 %v1194, %v1197
      %v1200 = vmul.f32 %v1195, %v1197
      %v1202 = vperm.slane %v1151, 0
      %v1204 = vadd.f32 %v1199, %v1202
      %v1205 = vadd.f32 %v1200, %v1202
      %v1206 = vmul.f32 %v1204, 0.70710677
      %v1207 = vmul.f32 %v1205, 0.70710677
      %v1208 = vand.u32 2147483647, %v1206
      %v1209 = vand.u32 2147483647, %v1207
      %v1210 = vmul.f32 %v1208, 0.3275911
      %v1211 = vmul.f32 %v1209, 0.3275911
      %v1212 = vadd.f32 %v1210, 1.0
      %v1213 = vadd.f32 %v1211, 1.0
      %v1214 = vrcp.pop %v1212
      %v1215 = vmul.f32 %v1212, %v1214
      %v1216 = vsub.f32 1.0, %v1215
      %v1217 = vmul.f32 %v1214, %v1216
      %v1218 = vadd.f32 %v1214, %v1217
      %vm1219 = vweird.f32 %v1212
      %vm1220 = vweird.f32 %v1214
      %vm1221 = vmor %vm1219, %vm1220
      %v1222 = vsel %vm1221, %v1214, %v1218
      %v1223 = vand.u32 2147483647, %v1212
      %vm1224 = vcmp.eq.f32.partialorder %v1223, 8.507059e+37
      %v1225 = vand.u32 %v1212, 2147483648
      %v1226 = vor.u32 1.1754944e-38, %v1225
      %v1227 = vsel %vm1224, %v1226, %v1222
      %v1228 = vmul.f32 1.0, %v1227
      %v1229 = vrcp.pop %v1213
      %v1230 = vmul.f32 %v1213, %v1229
      %v1231 = vsub.f32 1.0, %v1230
      %v1232 = vmul.f32 %v1229, %v1231
      %v1233 = vadd.f32 %v1229, %v1232
      %vm1234 = vweird.f32 %v1213
      %vm1235 = vweird.f32 %v1229
      %vm1236 = vmor %vm1234, %vm1235
      %v1237 = vsel %vm1236, %v1229, %v1233
      %v1238 = vand.u32 2147483647, %v1213
      %vm1239 = vcmp.eq.f32.partialorder %v1238, 8.507059e+37
      %v1240 = vand.u32 %v1213, 2147483648
      %v1241 = vor.u32 1.1754944e-38, %v1240
      %v1242 = vsel %vm1239, %v1241, %v1237
      %v1243 = vmul.f32 1.0, %v1242
      %v1244 = vmul.f32 %v1228, 1.0614054
      %v1245 = vmul.f32 %v1243, 1.0614054
      %v1246 = vadd.f32 %v1244, -1.4531521
      %v1247 = vadd.f32 %v1245, -1.4531521
      %v1248 = vmul.f32 %v1228, %v1246
      %v1249 = vmul.f32 %v1243, %v1247
      %v1250 = vadd.f32 %v1248, 1.4214138
      %v1251 = vadd.f32 %v1249, 1.4214138
      %v1252 = vmul.f32 %v1228, %v1250
      %v1253 = vmul.f32 %v1243, %v1251
      %v1254 = vadd.f32 %v1252, -0.28449672
      %v1255 = vadd.f32 %v1253, -0.28449672
      %v1256 = vmul.f32 %v1228, %v1254
      %v1257 = vmul.f32 %v1243, %v1255
      %v1258 = vadd.f32 %v1256, 0.2548296
      %v1259 = vadd.f32 %v1257, 0.2548296
      %v1260 = vmul.f32 %v1228, %v1258
      %v1261 = vmul.f32 %v1243, %v1259
      %v1262 = vsub.f32 0.0, %v1208
      %v1263 = vsub.f32 0.0, %v1209
      %v1264 = vmul.f32 %v1262, %v1208
      %v1265 = vmul.f32 %v1263, %v1209
      %v1266 = vmul.f32 %v1264, 1.442695
      %v1267 = vpow.pop %v1266
      %v1268 = vmul.f32 %v1265, 1.442695
      %v1269 = vpow.pop %v1268
      %v1270 = vmul.f32 %v1260, %v1267
      %v1271 = vmul.f32 %v1261, %v1269
      %v1272 = vsub.f32 1.0, %v1270
      %v1273 = vsub.f32 1.0, %v1271
      %vm1274 = vcmp.ge.f32.partialorder %v1206, 0.0
      %vm1275 = vcmp.ge.f32.partialorder %v1207, 0.0
      %v1276 = vsub.f32 0.0, %v1272
      %v1277 = vsub.f32 0.0, %v1273
      %v1278 = vsel %vm1274, %v1272, %v1276
      %v1279 = vsel %vm1275, %v1273, %v1277
      %v1280 = vmul.f32 %v1204, 0.5
      %v1281 = vmul.f32 %v1205, 0.5
      %v1282 = vadd.f32 %v1278, 1.0
      %v1283 = vadd.f32 %v1279, 1.0
      %v1284 = vmul.f32 %v1280, %v1282
      %v1285 = vmul.f32 %v1281, %v1283
      %v1286 = vadd.f32 %v842, %v1284
      %v1287 = vadd.f32 %v843, %v1285
      %v1288 = vmul.f32 %v1286, %v394
      %v1289 = vmul.f32 %v1287, %v399
      %1290 = vst.msk [vmem:[#allocation2 + $0x10] sm:$0xff] %vm380, %v1288
      %1291 = vst.msk [vmem:[#allocation2 + $0x18] sm:$0xff] %vm380, %v1289
      %v1292 = vld [vmem:[#allocation2] sm:$0xff]
      %v1293 = vld [vmem:[#allocation2 + $0x8] sm:$0xff]
      %v1294 = vld [vmem:[#allocation2 + $0x10] sm:$0xff]
      %v1295 = vld [vmem:[#allocation2 + $0x18] sm:$0xff]
      %v1296 = vld [vmem:[#allocation2 + $0x20] sm:$0xff]
      %v1297 = vld [vmem:[#allocation2 + $0x28] sm:$0xff]
      %s1298 = scalar_lea.vmem %s2, 8
      %v1299 = vld [vmem:[%s1298] sm:$0x7]
      %s1300 = scalar_lea.vmem %s3, 2
      %v1301 = vld [vmem:[%s1300] sm:$0x1]
      %v1303 = vperm.slane %v1301, 0
      %v1305 = vadd.f32 %v1303, 0.0
      %v1306 = vperm.slane %v1299, 0
      %v1307 = vmul.f32 %v1292, %v1306
      %v1308 = vmul.f32 %v1293, %v1306
      %v1309 = vmul.f32 %v1294, %v1306
      %v1310 = vadd.f32 %v1305, %v1307
      %v1311 = vadd.f32 %v1305, %v1308
      %v1312 = vadd.f32 %v1305, %v1309
      %v1313 = vperm.slane %v1299, 1
      %v1314 = vmul.f32 %v1294, %v1313
      %v1315 = vmul.f32 %v1295, %v1313
      %v1318 = vrot.slane %v1314, 1
      %v1319 = vrot.slane %v1315, 1
      %v1320 = vsel %vm427, %v1318, %v1319
      %v1324 = vadd.f32 %v1310, %v1318
      %v1325 = vadd.f32 %v1311, %v1320
      %v1326 = vadd.f32 %v1312, %v1319
      %v1327 = vperm.slane %v1299, 2
      %v1328 = vmul.f32 %v1295, %v1327
      %v1329 = vmul.f32 %v1296, %v1327
      %v1330 = vmul.f32 %v1297, %v1327
      %v1334 = vrot.slane %v1328, 2
      %v1335 = vrot.slane %v1329, 2
      %v1336 = vsel %vm444, %v1334, %v1335
      %v1337 = vrot.slane %v1330, 2
      %v1338 = vsel %vm444, %v1335, %v1337
      %v1342 = vadd.f32 %v1324, %v1334
      %v1343 = vadd.f32 %v1325, %v1336
      %v1344 = vadd.f32 %v1326, %v1338
      %s1345 = scalar_lea.vmem %s4, 2
      %v1346 = vld [vmem:[%s1345] sm:$0x1]
      %s1347 = scalar_lea.vmem %s5, 2
      %v1348 = vld [vmem:[%s1347] sm:$0x1]
      %v1349 = vsel %vm458, %v1342, 0.0
      %1350 = vadd.xlane.f32.xlu0 %v1349
      %v1351 = vpop.xlane.xlu0 %1350
      %v1352 = vsel %vm380, %v1343, 0.0
      %1353 = vadd.xlane.f32.xlu0 %v1352
      %v1354 = vpop.xlane.xlu0 %1353
      %v1355 = vsel %vm465, %v1344, 0.0
      %1356 = vadd.xlane.f32.xlu0 %v1355
      %v1357 = vpop.xlane.xlu0 %1356
      %v1358 = vmul.f32 %v1351, %v475
      %v1359 = vmul.f32 %v1354, %v475
      %v1360 = vmul.f32 %v1357, %v475
      %v1361 = vsub.f32 %v1342, %v1358
      %v1362 = vsub.f32 %v1343, %v1359
      %v1363 = vsub.f32 %v1344, %v1360
      %v1364 = vmul.f32 %v1361, %v1361
      %v1365 = vmul.f32 %v1362, %v1362
      %v1366 = vmul.f32 %v1363, %v1363
      %v1367 = vsel %vm458, %v1364, 0.0
      %1368 = vadd.xlane.f32.xlu0 %v1367
      %v1369 = vpop.xlane.xlu0 %1368
      %v1370 = vsel %vm380, %v1365, 0.0
      %1371 = vadd.xlane.f32.xlu0 %v1370
      %v1372 = vpop.xlane.xlu0 %1371
      %v1373 = vsel %vm465, %v1366, 0.0
      %1374 = vadd.xlane.f32.xlu0 %v1373
      %v1375 = vpop.xlane.xlu0 %1374
      %v1376 = vmul.f32 %v1369, %v475
      %v1377 = vmul.f32 %v1372, %v475
      %v1378 = vmul.f32 %v1375, %v475
      %v1379 = vadd.f32 %v1376, 1e-05
      %v1380 = vadd.f32 %v1377, 1e-05
      %v1381 = vadd.f32 %v1378, 1e-05
      %v1382 = vrsqrt.pop %v1379
      %v1383 = vmul.f32 %v1382, %v1379
      %v1384 = vmul.f32 %v1383, %v1382
      %v1385 = vmul.f32 0.5, %v1384
      %v1386 = vsub.f32 1.5, %v1385
      %v1387 = vmul.f32 %v1382, %v1386
      %vm1388 = vweird.f32 %v1379
      %vm1389 = vweird.f32 %v1382
      %vm1390 = vmor %vm1388, %vm1389
      %v1391 = vsel %vm1390, %v1382, %v1387
      %v1392 = vrsqrt.pop %v1380
      %v1393 = vmul.f32 %v1392, %v1380
      %v1394 = vmul.f32 %v1393, %v1392
      %v1395 = vmul.f32 0.5, %v1394
      %v1396 = vsub.f32 1.5, %v1395
      %v1397 = vmul.f32 %v1392, %v1396
      %vm1398 = vweird.f32 %v1380
      %vm1399 = vweird.f32 %v1392
      %vm1400 = vmor %vm1398, %vm1399
      %v1401 = vsel %vm1400, %v1392, %v1397
      %v1402 = vrsqrt.pop %v1381
      %v1403 = vmul.f32 %v1402, %v1381
      %v1404 = vmul.f32 %v1403, %v1402
      %v1405 = vmul.f32 0.5, %v1404
      %v1406 = vsub.f32 1.5, %v1405
      %v1407 = vmul.f32 %v1402, %v1406
      %vm1408 = vweird.f32 %v1381
      %vm1409 = vweird.f32 %v1402
      %vm1410 = vmor %vm1408, %vm1409
      %v1411 = vsel %vm1410, %v1402, %v1407
      %v1412 = vmul.f32 %v1361, %v1391
      %v1413 = vmul.f32 %v1362, %v1401
      %v1414 = vmul.f32 %v1363, %v1411
      %v1416 = vperm.slane %v1346, 0
      %v1418 = vmul.f32 %v1412, %v1416
      %v1419 = vmul.f32 %v1413, %v1416
      %v1420 = vmul.f32 %v1414, %v1416
      %v1422 = vperm.slane %v1348, 0
      %v1424 = vadd.f32 %v1418, %v1422
      %v1425 = vadd.f32 %v1419, %v1422
      %v1426 = vadd.f32 %v1420, %v1422
      %v1427 = vmul.f32 %v1424, 0.70710677
      %v1428 = vmul.f32 %v1425, 0.70710677
      %v1429 = vmul.f32 %v1426, 0.70710677
      %v1430 = vand.u32 2147483647, %v1427
      %v1431 = vand.u32 2147483647, %v1428
      %v1432 = vand.u32 2147483647, %v1429
      %v1433 = vmul.f32 %v1430, 0.3275911
      %v1434 = vmul.f32 %v1431, 0.3275911
      %v1435 = vmul.f32 %v1432, 0.3275911
      %v1436 = vadd.f32 %v1433, 1.0
      %v1437 = vadd.f32 %v1434, 1.0
      %v1438 = vadd.f32 %v1435, 1.0
      %v1439 = vrcp.pop %v1436
      %v1440 = vmul.f32 %v1436, %v1439
      %v1441 = vsub.f32 1.0, %v1440
      %v1442 = vmul.f32 %v1439, %v1441
      %v1443 = vadd.f32 %v1439, %v1442
      %vm1444 = vweird.f32 %v1436
      %vm1445 = vweird.f32 %v1439
      %vm1446 = vmor %vm1444, %vm1445
      %v1447 = vsel %vm1446, %v1439, %v1443
      %v1448 = vand.u32 2147483647, %v1436
      %vm1449 = vcmp.eq.f32.partialorder %v1448, 8.507059e+37
      %v1450 = vand.u32 %v1436, 2147483648
      %v1451 = vor.u32 1.1754944e-38, %v1450
      %v1452 = vsel %vm1449, %v1451, %v1447
      %v1453 = vmul.f32 1.0, %v1452
      %v1454 = vrcp.pop %v1437
      %v1455 = vmul.f32 %v1437, %v1454
      %v1456 = vsub.f32 1.0, %v1455
      %v1457 = vmul.f32 %v1454, %v1456
      %v1458 = vadd.f32 %v1454, %v1457
      %vm1459 = vweird.f32 %v1437
      %vm1460 = vweird.f32 %v1454
      %vm1461 = vmor %vm1459, %vm1460
      %v1462 = vsel %vm1461, %v1454, %v1458
      %v1463 = vand.u32 2147483647, %v1437
      %vm1464 = vcmp.eq.f32.partialorder %v1463, 8.507059e+37
      %v1465 = vand.u32 %v1437, 2147483648
      %v1466 = vor.u32 1.1754944e-38, %v1465
      %v1467 = vsel %vm1464, %v1466, %v1462
      %v1468 = vmul.f32 1.0, %v1467
      %v1469 = vrcp.pop %v1438
      %v1470 = vmul.f32 %v1438, %v1469
      %v1471 = vsub.f32 1.0, %v1470
      %v1472 = vmul.f32 %v1469, %v1471
      %v1473 = vadd.f32 %v1469, %v1472
      %vm1474 = vweird.f32 %v1438
      %vm1475 = vweird.f32 %v1469
      %vm1476 = vmor %vm1474, %vm1475
      %v1477 = vsel %vm1476, %v1469, %v1473
      %v1478 = vand.u32 2147483647, %v1438
      %vm1479 = vcmp.eq.f32.partialorder %v1478, 8.507059e+37
      %v1480 = vand.u32 %v1438, 2147483648
      %v1481 = vor.u32 1.1754944e-38, %v1480
      %v1482 = vsel %vm1479, %v1481, %v1477
      %v1483 = vmul.f32 1.0, %v1482
      %v1484 = vmul.f32 %v1453, 1.0614054
      %v1485 = vmul.f32 %v1468, 1.0614054
      %v1486 = vmul.f32 %v1483, 1.0614054
      %v1487 = vadd.f32 %v1484, -1.4531521
      %v1488 = vadd.f32 %v1485, -1.4531521
      %v1489 = vadd.f32 %v1486, -1.4531521
      %v1490 = vmul.f32 %v1453, %v1487
      %v1491 = vmul.f32 %v1468, %v1488
      %v1492 = vmul.f32 %v1483, %v1489
      %v1493 = vadd.f32 %v1490, 1.4214138
      %v1494 = vadd.f32 %v1491, 1.4214138
      %v1495 = vadd.f32 %v1492, 1.4214138
      %v1496 = vmul.f32 %v1453, %v1493
      %v1497 = vmul.f32 %v1468, %v1494
      %v1498 = vmul.f32 %v1483, %v1495
      %v1499 = vadd.f32 %v1496, -0.28449672
      %v1500 = vadd.f32 %v1497, -0.28449672
      %v1501 = vadd.f32 %v1498, -0.28449672
      %v1502 = vmul.f32 %v1453, %v1499
      %v1503 = vmul.f32 %v1468, %v1500
      %v1504 = vmul.f32 %v1483, %v1501
      %v1505 = vadd.f32 %v1502, 0.2548296
      %v1506 = vadd.f32 %v1503, 0.2548296
      %v1507 = vadd.f32 %v1504, 0.2548296
      %v1508 = vmul.f32 %v1453, %v1505
      %v1509 = vmul.f32 %v1468, %v1506
      %v1510 = vmul.f32 %v1483, %v1507
      %v1511 = vsub.f32 0.0, %v1430
      %v1512 = vsub.f32 0.0, %v1431
      %v1513 = vsub.f32 0.0, %v1432
      %v1514 = vmul.f32 %v1511, %v1430
      %v1515 = vmul.f32 %v1512, %v1431
      %v1516 = vmul.f32 %v1513, %v1432
      %v1517 = vmul.f32 %v1514, 1.442695
      %v1518 = vpow.pop %v1517
      %v1519 = vmul.f32 %v1515, 1.442695
      %v1520 = vpow.pop %v1519
      %v1521 = vmul.f32 %v1516, 1.442695
      %v1522 = vpow.pop %v1521
      %v1523 = vmul.f32 %v1508, %v1518
      %v1524 = vmul.f32 %v1509, %v1520
      %v1525 = vmul.f32 %v1510, %v1522
      %v1526 = vsub.f32 1.0, %v1523
      %v1527 = vsub.f32 1.0, %v1524
      %v1528 = vsub.f32 1.0, %v1525
      %vm1529 = vcmp.ge.f32.partialorder %v1427, 0.0
      %vm1530 = vcmp.ge.f32.partialorder %v1428, 0.0
      %vm1531 = vcmp.ge.f32.partialorder %v1429, 0.0
      %v1532 = vsub.f32 0.0, %v1526
      %v1533 = vsub.f32 0.0, %v1527
      %v1534 = vsub.f32 0.0, %v1528
      %v1535 = vsel %vm1529, %v1526, %v1532
      %v1536 = vsel %vm1530, %v1527, %v1533
      %v1537 = vsel %vm1531, %v1528, %v1534
      %v1538 = vmul.f32 %v1424, 0.5
      %v1539 = vmul.f32 %v1425, 0.5
      %v1540 = vmul.f32 %v1426, 0.5
      %v1541 = vadd.f32 %v1535, 1.0
      %v1542 = vadd.f32 %v1536, 1.0
      %v1543 = vadd.f32 %v1537, 1.0
      %v1544 = vmul.f32 %v1538, %v1541
      %v1545 = vmul.f32 %v1539, %v1542
      %v1546 = vmul.f32 %v1540, %v1543
      %s1547 = scalar_lea.vmem %s6, 16
      %v1548 = vld [vmem:[%s1547] sm:$0xff]
      %s1549 = scalar_lea.vmem %s7, 2
      %v1550 = vld [vmem:[%s1549] sm:$0x1]
      %v1552 = vperm.slane %v1550, 0
      %v1557 = vrot.slane %v1544, 7
      %v1558 = vrot.slane %v1545, 7
      %v1559 = vsel %vm673, %v1557, %v1558
      %v1560 = vrot.slane %v1546, 7
      %v1561 = vsel %vm673, %v1558, %v1560
      %v1562 = vsel %vm380, %v1559, 0
      %v1564 = vsel %vm380, %v1561, 0
      %1566 = vmatpush.msra.mxu0 0.0
      %1567 = vmatpush.msra.mxu0 0.0
      %1568 = vmatpush.msra.mxu0 0.0
      %1569 = vmatpush.msra.mxu0 0.0
      %1570 = vmatpush.msra.mxu0 0.0
      %1571 = vmatpush.msra.mxu0 0.0
      %1572 = vmatpush.msra.mxu0 0.0
      %1573 = vmatpush.msra.mxu0 0.0
      %1574 = vmatpush.msra.mxu0 0.0
      %1575 = vmatpush.msra.mxu0 0.0
      %1576 = vmatpush.msra.mxu0 0.0
      %1577 = vmatpush.msra.mxu0 0.0
      %1578 = vmatpush.msra.mxu0 0.0
      %1579 = vmatpush.msra.mxu0 0.0
      %1580 = vmatpush.msra.mxu0 0.0
      %1581 = vmatpush.msra.mxu0 %v1548
      %1582 = vmatmul.f32.gmra.mxu0 %v1562
      %v1583 = vpop.f32.mrf.mxu0
      %v1584 = vadd.f32 %v1552, %v1583
      %1585 = vmatmul.f32.gmra.mxu0 %v1564
      %v1586 = vpop.f32.mrf.mxu0
      %v1587 = vadd.f32 %v1552, %v1586
      %1588 = vdwg.mxu0
      %s1589 = scalar_lea.vmem %s8, 2
      %v1590 = vld [vmem:[%s1589] sm:$0x1]
      %s1591 = scalar_lea.vmem %s9, 2
      %v1592 = vld [vmem:[%s1591] sm:$0x1]
      %v1593 = vsel %vm380, %v1584, 0.0
      %1594 = vadd.xlane.f32.xlu0 %v1593
      %v1595 = vpop.xlane.xlu0 %1594
      %v1596 = vsel %vm380, %v1587, 0.0
      %1597 = vadd.xlane.f32.xlu0 %v1596
      %v1598 = vpop.xlane.xlu0 %1597
      %v1599 = vmul.f32 %v1595, %v475
      %v1600 = vmul.f32 %v1598, %v475
      %v1601 = vsub.f32 %v1584, %v1599
      %v1602 = vsub.f32 %v1587, %v1600
      %v1603 = vmul.f32 %v1601, %v1601
      %v1604 = vmul.f32 %v1602, %v1602
      %v1605 = vsel %vm380, %v1603, 0.0
      %1606 = vadd.xlane.f32.xlu0 %v1605
      %v1607 = vpop.xlane.xlu0 %1606
      %v1608 = vsel %vm380, %v1604, 0.0
      %1609 = vadd.xlane.f32.xlu0 %v1608
      %v1610 = vpop.xlane.xlu0 %1609
      %v1611 = vmul.f32 %v1607, %v475
      %v1612 = vmul.f32 %v1610, %v475
      %v1613 = vadd.f32 %v1611, 1e-05
      %v1614 = vadd.f32 %v1612, 1e-05
      %v1615 = vrsqrt.pop %v1613
      %v1616 = vmul.f32 %v1615, %v1613
      %v1617 = vmul.f32 %v1616, %v1615
      %v1618 = vmul.f32 0.5, %v1617
      %v1619 = vsub.f32 1.5, %v1618
      %v1620 = vmul.f32 %v1615, %v1619
      %vm1621 = vweird.f32 %v1613
      %vm1622 = vweird.f32 %v1615
      %vm1623 = vmor %vm1621, %vm1622
      %v1624 = vsel %vm1623, %v1615, %v1620
      %v1625 = vrsqrt.pop %v1614
      %v1626 = vmul.f32 %v1625, %v1614
      %v1627 = vmul.f32 %v1626, %v1625
      %v1628 = vmul.f32 0.5, %v1627
      %v1629 = vsub.f32 1.5, %v1628
      %v1630 = vmul.f32 %v1625, %v1629
      %vm1631 = vweird.f32 %v1614
      %vm1632 = vweird.f32 %v1625
      %vm1633 = vmor %vm1631, %vm1632
      %v1634 = vsel %vm1633, %v1625, %v1630
      %v1635 = vmul.f32 %v1601, %v1624
      %v1636 = vmul.f32 %v1602, %v1634
      %v1638 = vperm.slane %v1590, 0
      %v1640 = vmul.f32 %v1635, %v1638
      %v1641 = vmul.f32 %v1636, %v1638
      %v1643 = vperm.slane %v1592, 0
      %v1645 = vadd.f32 %v1640, %v1643
      %v1646 = vadd.f32 %v1641, %v1643
      %v1647 = vmul.f32 %v1645, 0.70710677
      %v1648 = vmul.f32 %v1646, 0.70710677
      %v1649 = vand.u32 2147483647, %v1647
      %v1650 = vand.u32 2147483647, %v1648
      %v1651 = vmul.f32 %v1649, 0.3275911
      %v1652 = vmul.f32 %v1650, 0.3275911
      %v1653 = vadd.f32 %v1651, 1.0
      %v1654 = vadd.f32 %v1652, 1.0
      %v1655 = vrcp.pop %v1653
      %v1656 = vmul.f32 %v1653, %v1655
      %v1657 = vsub.f32 1.0, %v1656
      %v1658 = vmul.f32 %v1655, %v1657
      %v1659 = vadd.f32 %v1655, %v1658
      %vm1660 = vweird.f32 %v1653
      %vm1661 = vweird.f32 %v1655
      %vm1662 = vmor %vm1660, %vm1661
      %v1663 = vsel %vm1662, %v1655, %v1659
      %v1664 = vand.u32 2147483647, %v1653
      %vm1665 = vcmp.eq.f32.partialorder %v1664, 8.507059e+37
      %v1666 = vand.u32 %v1653, 2147483648
      %v1667 = vor.u32 1.1754944e-38, %v1666
      %v1668 = vsel %vm1665, %v1667, %v1663
      %v1669 = vmul.f32 1.0, %v1668
      %v1670 = vrcp.pop %v1654
      %v1671 = vmul.f32 %v1654, %v1670
      %v1672 = vsub.f32 1.0, %v1671
      %v1673 = vmul.f32 %v1670, %v1672
      %v1674 = vadd.f32 %v1670, %v1673
      %vm1675 = vweird.f32 %v1654
      %vm1676 = vweird.f32 %v1670
      %vm1677 = vmor %vm1675, %vm1676
      %v1678 = vsel %vm1677, %v1670, %v1674
      %v1679 = vand.u32 2147483647, %v1654
      %vm1680 = vcmp.eq.f32.partialorder %v1679, 8.507059e+37
      %v1681 = vand.u32 %v1654, 2147483648
      %v1682 = vor.u32 1.1754944e-38, %v1681
      %v1683 = vsel %vm1680, %v1682, %v1678
      %v1684 = vmul.f32 1.0, %v1683
      %v1685 = vmul.f32 %v1669, 1.0614054
      %v1686 = vmul.f32 %v1684, 1.0614054
      %v1687 = vadd.f32 %v1685, -1.4531521
      %v1688 = vadd.f32 %v1686, -1.4531521
      %v1689 = vmul.f32 %v1669, %v1687
      %v1690 = vmul.f32 %v1684, %v1688
      %v1691 = vadd.f32 %v1689, 1.4214138
      %v1692 = vadd.f32 %v1690, 1.4214138
      %v1693 = vmul.f32 %v1669, %v1691
      %v1694 = vmul.f32 %v1684, %v1692
      %v1695 = vadd.f32 %v1693, -0.28449672
      %v1696 = vadd.f32 %v1694, -0.28449672
      %v1697 = vmul.f32 %v1669, %v1695
      %v1698 = vmul.f32 %v1684, %v1696
      %v1699 = vadd.f32 %v1697, 0.2548296
      %v1700 = vadd.f32 %v1698, 0.2548296
      %v1701 = vmul.f32 %v1669, %v1699
      %v1702 = vmul.f32 %v1684, %v1700
      %v1703 = vsub.f32 0.0, %v1649
      %v1704 = vsub.f32 0.0, %v1650
      %v1705 = vmul.f32 %v1703, %v1649
      %v1706 = vmul.f32 %v1704, %v1650
      %v1707 = vmul.f32 %v1705, 1.442695
      %v1708 = vpow.pop %v1707
      %v1709 = vmul.f32 %v1706, 1.442695
      %v1710 = vpow.pop %v1709
      %v1711 = vmul.f32 %v1701, %v1708
      %v1712 = vmul.f32 %v1702, %v1710
      %v1713 = vsub.f32 1.0, %v1711
      %v1714 = vsub.f32 1.0, %v1712
      %vm1715 = vcmp.ge.f32.partialorder %v1647, 0.0
      %vm1716 = vcmp.ge.f32.partialorder %v1648, 0.0
      %v1717 = vsub.f32 0.0, %v1713
      %v1718 = vsub.f32 0.0, %v1714
      %v1719 = vsel %vm1715, %v1713, %v1717
      %v1720 = vsel %vm1716, %v1714, %v1718
      %v1721 = vmul.f32 %v1645, 0.5
      %v1722 = vmul.f32 %v1646, 0.5
      %v1723 = vadd.f32 %v1719, 1.0
      %v1724 = vadd.f32 %v1720, 1.0
      %v1725 = vmul.f32 %v1721, %v1723
      %v1726 = vmul.f32 %v1722, %v1724
      %v1727 = vadd.f32 %v1286, %v1725
      %v1728 = vadd.f32 %v1287, %v1726
      %v1729 = vmul.f32 %v1727, %v394
      %v1730 = vmul.f32 %v1728, %v399
      %1731 = vst.msk [vmem:[%s379] sm:$0xff] %vm380, %v1729
      %1732 = vst.msk [vmem:[%s379 + $0x8] sm:$0xff] %vm380, %v1730
      %p1733 = scmp.lt.s32.totalorder %s21, 1
      %s1734 = scalar_select %p1733, %s21, 1
      %s1735 = smul.addr %s1734, 2
      %s1736 = smul.addr %s1735, 8
      %s1737 = scalar_lea.vmem %s10, %s1736
      // Predicated region
      $region61: #{tpu_custom_call.1} parent=59 // pred_check
        %p1738 = pneg %p259
      $region62: #{tpu_custom_call.1} parent=59 // pred_check_branch
        %1740 = sbr.rel (%p1738) target = $region64
      $region63: #{tpu_custom_call.1} parent=59 // pred_region
        _
      $region64: #{tpu_custom_call.1} parent=59 // pred_fallthru
        _
    $region60: #{tpu_custom_call.1} parent=5 // pred_fallthru
      _
    %p1741 = scmp.le.s32.totalorder 2, %s16
    // Predicated region
    $region65: #{tpu_custom_call.1} parent=5 // pred_check
      %p1742 = pneg %p1741
    $region66: #{tpu_custom_call.1} parent=5 // pred_check_branch
      %1744 = sbr.rel (%p1742) target = $region68
    $region67: #{tpu_custom_call.1} parent=5 // pred_region
      %s1745 = ssub.s32 %s16, 2
      // Predicated region
      $region69: #{tpu_custom_call.1} parent=67 // pred_check
        %p1746 = pneg %p265
      $region70: #{tpu_custom_call.1} parent=67 // pred_check_branch
        %1748 = sbr.rel (%p1746) target = $region72
      $region71: #{tpu_custom_call.1} parent=67 // pred_region
        %p1749 = scmp.lt.s32.totalorder %s22, 1
        %s1750 = scalar_select %p1749, %s22, 1
        %s1751 = smul.addr %s1750, 2
        %s1752 = smul.addr %s1751, 8
        %s1753 = scalar_lea.vmem %s10, %s1752
      $region72: #{tpu_custom_call.1} parent=67 // pred_fallthru
        _
    $region68: #{tpu_custom_call.1} parent=5 // pred_fallthru
      _
  $region6: #{tpu_custom_call.1} parent=0 // loop_footer
    %s20 = sadd.s32 1, %s16
  $region7: #{tpu_custom_call.1} parent=0 // loop_footer_branch
    %15 = sbr.rel target = $region3
  $region8: #{tpu_custom_call.1} parent=0 // loop_exit
    _

</llo_original>
